<compile_context>
chip_gen: v6e
topology: v6e:2x2x1
jax: 0.10.0
libtpu: 0.0.40
codegen_flags: <defaults>
</compile_context>

<pallas_src>
import functools
import math

import jax
import jax.numpy as jnp
from jax import lax
from jax.experimental import pallas as pl
from jax.experimental.pallas import tpu as pltpu


def _round_up(x, m):
    return ((x + m - 1) // m) * m


# ----------------------------------------------------------------------------
# Fused bidirectional-LSTM + Linear kernel (grid=(2,): one point per direction)
# ----------------------------------------------------------------------------
def bilstm_kernel(x_ref, wih_ref, whh_ref, bg_ref, wemb_ref, bemb_ref,
                  out_ref, gx_sc, hall_sc, *, T, Bp, Hp):
    """Grid axis 0 = direction (0: forward in time, 1: reverse), 'arbitrary'.

    x_ref   : (T*Bp, nIn)        shared input (matmul dtype), batch padded to Bp
    wih_ref : (1, nIn, 4*Hp)     this direction's W_ih^T (gate-lane padded)
    whh_ref : (1, Hp, 4*Hp)      this direction's W_hh^T, always f32
    bg_ref  : (1, 1, 4*Hp)       (b_ih + b_hh) for this direction, f32
    wemb_ref: (1, Hp, nOut_p)    this direction's half of W_emb^T
    bemb_ref: (1, 1, nOut_p)     emb bias for dir 0, zeros for dir 1, f32
    out_ref : (T*Bp, nOut_p) f32 shared accumulator block (same block index
                                 for both grid points; grid runs sequentially)
    gx_sc   : (T*Bp, 4*Hp) f32   precomputed input projection (+ gate bias)
    hall_sc : (T*Bp, Hp)   f32   hidden-state archive for every timestep
    """
    d = pl.program_id(0)

    # (1) Input projection: one big MXU matmul, gate bias folded in once.
    gx_sc[...] = (jnp.dot(x_ref[...], wih_ref[0],
                          preferred_element_type=jnp.float32) + bg_ref[0])

    # (2) Recurrence. h / c are loop-carried vreg values; only h @ W_hh^T plus
    #     elementwise gate math sits on the per-step serial path. One unrolled
    #     body serves both directions via t_eff.
    whh = whh_ref[0]                               # (Hp, 4*Hp) f32
    h = jnp.zeros((Bp, Hp), jnp.float32)
    c = jnp.zeros((Bp, Hp), jnp.float32)
    # TODO(synk): pltpu.matmul_push_rhs(whh) once + matmul_acc_lhs/matmul_pop
    # per step to avoid re-streaming the RHS into the MXU every iteration.
    for t in range(T):
        t_eff = t + d * (T - 1 - 2 * t)            # d=0 -> t ; d=1 -> T-1-t
        r0 = pl.multiple_of(t_eff * Bp, Bp)        # sublane-aligned row offset
        gates = gx_sc[pl.ds(r0, Bp), :] + jnp.dot(
            h, whh, preferred_element_type=jnp.float32)
        # PyTorch gate ordering i, f, g, o; each gate owns one 128-lane block,
        # so these slices are whole-vreg selects (no cross-lane extracts).
        i = jax.nn.sigmoid(gates[:, 0 * Hp:1 * Hp])
        f = jax.nn.sigmoid(gates[:, 1 * Hp:2 * Hp])
        g = jnp.tanh(gates[:, 2 * Hp:3 * Hp])
        o = jax.nn.sigmoid(gates[:, 3 * Hp:4 * Hp])
        c = f * c + i * g
        h = o * jnp.tanh(c)
        hall_sc[pl.ds(r0, Bp), :] = h              # tile-aligned VMEM store

    # (3) Partial embedding for this direction: one lane-dense matmul on the
    #     VMEM-resident hidden archive, accumulated into the shared output
    #     block (direction axis is sequential => race-free; one HBM writeback).
    part = (jnp.dot(hall_sc[...].astype(wemb_ref.dtype), wemb_ref[0],
                    preferred_element_type=jnp.float32) + bemb_ref[0])

    @pl.when(d == 0)
    def _init():
        out_ref[...] = part

    @pl.when(d == 1)
    def _accumulate():
        out_ref[...] = out_ref[...] + part


# ----------------------------------------------------------------------------
# Wrapper
# ----------------------------------------------------------------------------
def bidirectional_lstm_forward(x, params, matmul_dtype=jnp.float32):
    """Pallas implementation of BidirectionalLSTM.forward: (T,B,nIn)->(T,B,nOut).

    matmul_dtype=jnp.bfloat16 halves x / W_ih / W_emb DMA bytes and uses the
    narrow-MXU path on every TPU generation (v5e's MXU takes bf16 natively);
    the recurrence (h @ W_hh) and all gate math stay f32.
    """
    T, B, nIn = x.shape
    H = params["w_hh_f"].shape[1]
    nOut = params["emb_w"].shape[0]
    md = matmul_dtype

    Bp = _round_up(B, 8)             # full sublane tile per timestep
    Hp = _round_up(H, 128)           # one 128-lane block per gate
    nOutp = _round_up(nOut, 128)     # lane-dense output stores
    H4p = 4 * Hp

    def pad_gate_cols(w):            # (..., 4H) -> (..., 4*Hp); zero pad lanes
        blocks = [jnp.pad(w[..., g * H:(g + 1) * H],
                          [(0, 0)] * (w.ndim - 1) + [(0, Hp - H)])
                  for g in range(4)]
        return jnp.concatenate(blocks, axis=-1)

    def prep_whh(w_hh):              # (4H, H) -> (Hp, 4*Hp); zero pad rows
        return jnp.pad(pad_gate_cols(w_hh.T), ((0, Hp - H), (0, 0)))

    # Batch padding done once in the wrapper (cheap XLA op, not per step).
    x_p = jnp.zeros((T, Bp, nIn), md).at[:, :B, :].set(x.astype(md))
    x2d = x_p.reshape(T * Bp, nIn)

    wih = jnp.stack([pad_gate_cols(params["w_ih_f"].T),
                     pad_gate_cols(params["w_ih_r"].T)]).astype(md)       # (2,nIn,4Hp)
    whh = jnp.stack([prep_whh(params["w_hh_f"]),
                     prep_whh(params["w_hh_r"])]).astype(jnp.float32)     # (2,Hp,4Hp)
    bg = jnp.stack([
        pad_gate_cols((params["b_ih_f"] + params["b_hh_f"]).reshape(1, 4 * H)),
        pad_gate_cols((params["b_ih_r"] + params["b_hh_r"]).reshape(1, 4 * H)),
    ]).astype(jnp.float32)                                                # (2,1,4Hp)

    emb_w_t = params["emb_w"].T                                           # (2H,nOut)
    wemb = jnp.stack([
        jnp.pad(emb_w_t[:H], ((0, Hp - H), (0, nOutp - nOut))),
        jnp.pad(emb_w_t[H:], ((0, Hp - H), (0, nOutp - nOut))),
    ]).astype(md)                                                         # (2,Hp,nOutp)
    bemb = jnp.stack([
        jnp.pad(params["emb_b"].reshape(1, nOut), ((0, 0), (0, nOutp - nOut))),
        jnp.zeros((1, nOutp), jnp.float32),
    ]).astype(jnp.float32)                                                # (2,1,nOutp)

    kernel = functools.partial(bilstm_kernel, T=T, Bp=Bp, Hp=Hp)

    out_p = pl.pallas_call(
        kernel,
        out_shape=jax.ShapeDtypeStruct((T * Bp, nOutp), jnp.float32),
        grid_spec=pltpu.PrefetchScalarGridSpec(
            num_scalar_prefetch=0,
            grid=(2,),  # one grid point per direction
            in_specs=[
                pl.BlockSpec((T * Bp, nIn), lambda d: (0, 0)),
                pl.BlockSpec((1, nIn, H4p), lambda d: (d, 0, 0)),
                pl.BlockSpec((1, Hp, H4p), lambda d: (d, 0, 0)),
                pl.BlockSpec((1, 1, H4p), lambda d: (d, 0, 0)),
                pl.BlockSpec((1, Hp, nOutp), lambda d: (d, 0, 0)),
                pl.BlockSpec((1, 1, nOutp), lambda d: (d, 0, 0)),
            ],
            # Same output block for both directions -> VMEM-resident
            # accumulator, single HBM writeback at the end of the grid.
            out_specs=pl.BlockSpec((T * Bp, nOutp), lambda d: (0, 0)),
            scratch_shapes=[
                pltpu.VMEM((T * Bp, H4p), jnp.float32),   # gx (input proj)
                pltpu.VMEM((T * Bp, Hp), jnp.float32),    # hidden archive
            ],
        ),
        # In-kernel accumulation across the direction axis requires sequential
        # execution (correct on every generation; see v7x TODO in header).
        compiler_params=pltpu.CompilerParams(
            dimension_semantics=("arbitrary",)),
    )(x2d, wih, whh, bg, wemb, bemb)

    return out_p.reshape(T, Bp, nOutp)[:, :B, :nOut]


# ----------------------------------------------------------------------------
# Pure-JAX reference (for correctness check)
# ----------------------------------------------------------------------------
def lstm_direction_ref(x, w_ih, w_hh, b_ih, b_hh):
    T, B, _ = x.shape
    H = w_hh.shape[1]

    def step(carry, x_t):
        h, c = carry
        gates = x_t @ w_ih.T + h @ w_hh.T + b_ih + b_hh
        i = jax.nn.sigmoid(gates[:, 0:H])
        f = jax.nn.sigmoid(gates[:, H:2 * H])
        g = jnp.tanh(gates[:, 2 * H:3 * H])
        o = jax.nn.sigmoid(gates[:, 3 * H:4 * H])
        c = f * c + i * g
        h = o * jnp.tanh(c)
        return (h, c), h

    init = (jnp.zeros((B, H), jnp.float32), jnp.zeros((B, H), jnp.float32))
    _, hs = lax.scan(step, init, x)
    return hs


def bidirectional_lstm_ref(x, params):
    T, B, _ = x.shape
    h_fwd = lstm_direction_ref(x, params["w_ih_f"], params["w_hh_f"],
                               params["b_ih_f"], params["b_hh_f"])
    h_bwd = jnp.flip(
        lstm_direction_ref(jnp.flip(x, 0), params["w_ih_r"], params["w_hh_r"],
                           params["b_ih_r"], params["b_hh_r"]), 0)
    rec = jnp.concatenate([h_fwd, h_bwd], -1).reshape(T * B, -1)
    out = rec @ params["emb_w"].T + params["emb_b"]
    return out.reshape(T, B, -1)


# ----------------------------------------------------------------------------
# Deterministic parameter init (PyTorch-style uniform(-k, k))
# ----------------------------------------------------------------------------
def init_params(key, nIn, nHidden, nOut):
    ks = jax.random.split(key, 10)
    k_lstm = 1.0 / math.sqrt(nHidden)
    k_lin = 1.0 / math.sqrt(2 * nHidden)
    u = lambda k, shape, a: jax.random.uniform(k, shape, jnp.float32, -a, a)
    return {
        "w_ih_f": u(ks[0], (4 * nHidden, nIn), k_lstm),
        "w_hh_f": u(ks[1], (4 * nHidden, nHidden), k_lstm),
        "b_ih_f": u(ks[2], (4 * nHidden,), k_lstm),
        "b_hh_f": u(ks[3], (4 * nHidden,), k_lstm),
        "w_ih_r": u(ks[4], (4 * nHidden, nIn), k_lstm),
        "w_hh_r": u(ks[5], (4 * nHidden, nHidden), k_lstm),
        "b_ih_r": u(ks[6], (4 * nHidden,), k_lstm),
        "b_hh_r": u(ks[7], (4 * nHidden,), k_lstm),
        "emb_w": u(ks[8], (nOut, 2 * nHidden), k_lin),
        "emb_b": u(ks[9], (nOut,), k_lin),
    }


if __name__ == "__main__":
    T, B, nIn, nHidden, nOut = 8, 2, 16, 32, 16

    key = jax.random.PRNGKey(0)
    k_x, k_p = jax.random.split(key)
    x = jax.random.normal(k_x, (T, B, nIn), jnp.float32)
    params = init_params(k_p, nIn, nHidden, nOut)

    ref = bidirectional_lstm_ref(x, params)

    # f32 matmul path — exact check against the f32 reference.
    out = jax.block_until_ready(bidirectional_lstm_forward(x, params))
    assert out.shape == (T, B, nOut), out.shape
    assert jnp.allclose(out, ref, atol=1e-4, rtol=1e-4), \
        float(jnp.max(jnp.abs(out - ref)))

    # bf16 operand path (valid on v5e/v6e/v7x): only x @ W_ih and the final
    # embedding use bf16 operands; the recurrence and gate math stay f32.
    out_bf16 = jax.block_until_ready(
        bidirectional_lstm_forward(x, params, matmul_dtype=jnp.bfloat16))
    assert jnp.allclose(out_bf16, ref, atol=5e-2, rtol=5e-2), \
        float(jnp.max(jnp.abs(out_bf16 - ref)))

    print("KERNEL_OK")
</pallas_src>

<mosaic_0001>
module attributes {stable_mosaic.version = 11 : i64} {
  func.func @bilstm_kernel(%arg0: i32, %arg1: memref<64x16xf32, #tpu.memory_space<vmem>>, %arg2: memref<1x16x512xf32, #tpu.memory_space<vmem>>, %arg3: memref<1x128x512xf32, #tpu.memory_space<vmem>>, %arg4: memref<1x1x512xf32, #tpu.memory_space<vmem>>, %arg5: memref<1x128x128xf32, #tpu.memory_space<vmem>>, %arg6: memref<1x1x128xf32, #tpu.memory_space<vmem>>, %arg7: memref<64x128xf32, #tpu.memory_space<vmem>>, %arg8: memref<64x512xf32, #tpu.memory_space<vmem>>, %arg9: memref<64x128xf32, #tpu.memory_space<vmem>>) attributes {dimension_semantics = [#tpu.dimension_semantics<arbitrary>], iteration_bounds = array<i64: 2>, scalar_prefetch = 0 : i64, scratch_operands = 2 : i64, tpu.core_type = #tpu.core_type<tc>, window_params = [{pipeline_mode = #tpu.pipeline_mode<synchronous>, transform_indices = @transform_0, window_bounds = array<i64: 64, 16>}, {transform_indices = @transform_1, window_bounds = array<i64: 1, 16, 512>}, {transform_indices = @transform_2, window_bounds = array<i64: 1, 128, 512>}, {transform_indices = @transform_3, window_bounds = array<i64: 1, 1, 512>}, {transform_indices = @transform_4, window_bounds = array<i64: 1, 128, 128>}, {transform_indices = @transform_5, window_bounds = array<i64: 1, 1, 128>}, {pipeline_mode = #tpu.pipeline_mode<synchronous>, transform_indices = @transform_6, window_bounds = array<i64: 64, 128>}]} {
    %c0 = arith.constant 0 : index
    %c0_0 = arith.constant 0 : index
    %0 = vector.load %arg1[%c0, %c0_0] : memref<64x16xf32, #tpu.memory_space<vmem>>, vector<64x16xf32>
    %c0_1 = arith.constant 0 : index
    %c0_2 = arith.constant 0 : index
    %c0_3 = arith.constant 0 : index
    %1 = vector.load %arg2[%c0_1, %c0_2, %c0_3] : memref<1x16x512xf32, #tpu.memory_space<vmem>>, vector<1x16x512xf32>
    %2 = vector.shape_cast %1 : vector<1x16x512xf32> to vector<16x512xf32>
    %cst = arith.constant dense<0.000000e+00> : vector<64x512xf32>
    %3 = tpu.matmul %0, %2, %cst {dimension_numbers = #tpu.dot_dimension_numbers<[1], [0], [0], [1], [0, 0, 1, 1], [], []>} : vector<64x16xf32>, vector<16x512xf32>, vector<64x512xf32> -> vector<64x512xf32>
    %c0_4 = arith.constant 0 : index
    %c0_5 = arith.constant 0 : index
    %c0_6 = arith.constant 0 : index
    %4 = vector.load %arg4[%c0_4, %c0_5, %c0_6] : memref<1x1x512xf32, #tpu.memory_space<vmem>>, vector<1x1x512xf32>
    %5 = vector.shape_cast %4 : vector<1x1x512xf32> to vector<1x512xf32>
    %6 = vector.broadcast %5 : vector<1x512xf32> to vector<64x512xf32>
    %7 = arith.addf %3, %6 : vector<64x512xf32>
    %c0_7 = arith.constant 0 : index
    %c0_8 = arith.constant 0 : index
    %8 = vector.load %arg8[%c0_7, %c0_8] : memref<64x512xf32, #tpu.memory_space<vmem>>, vector<64x512xf32>
    tpu.vector_store %arg8[%c0_7, %c0_8], %7 {strides = array<i32>} : memref<64x512xf32, #tpu.memory_space<vmem>>, vector<64x512xf32>,
    %c0_9 = arith.constant 0 : index
    %c0_10 = arith.constant 0 : index
    %c0_11 = arith.constant 0 : index
    %9 = vector.load %arg3[%c0_9, %c0_10, %c0_11] : memref<1x128x512xf32, #tpu.memory_space<vmem>>, vector<1x128x512xf32>
    %10 = vector.shape_cast %9 : vector<1x128x512xf32> to vector<128x512xf32>
    %cst_12 = arith.constant 0.000000e+00 : f32
    %11 = vector.broadcast %cst_12 : f32 to vector<8x128xf32>
    %cst_13 = arith.constant 0.000000e+00 : f32
    %12 = vector.broadcast %cst_13 : f32 to vector<8x128xf32>
    %c7_i32 = arith.constant 7 : i32
    %13 = arith.muli %arg0, %c7_i32 : i32
    %c0_i32 = arith.constant 0 : i32
    %14 = arith.addi %c0_i32, %13 : i32
    %c8_i32 = arith.constant 8 : i32
    %15 = arith.muli %14, %c8_i32 : i32
    %16 = tpu.assume_multiple %15, 8 : i32
    %17 = arith.index_cast %16 : i32 to index
    %c0_14 = arith.constant 0 : index
    %18 = vector.load %arg8[%17, %c0_14] : memref<64x512xf32, #tpu.memory_space<vmem>>, vector<8x512xf32>
    %cst_15 = arith.constant dense<0.000000e+00> : vector<8x512xf32>
    %19 = tpu.matmul %11, %10, %cst_15 {dimension_numbers = #tpu.dot_dimension_numbers<[1], [0], [0], [1], [0, 0, 1, 1], [], []>} : vector<8x128xf32>, vector<128x512xf32>, vector<8x512xf32> -> vector<8x512xf32>
    %20 = arith.addf %18, %19 : vector<8x512xf32>
    %21 = vector.extract_strided_slice %20 {offsets = [0, 0], sizes = [8, 128], strides = [1, 1]} : vector<8x512xf32> to vector<8x128xf32>
    %22 = arith.negf %21 : vector<8x128xf32>
    %23 = math.exp %22 : vector<8x128xf32>
    %cst_16 = arith.constant 1.000000e+00 : f32
    %24 = vector.broadcast %cst_16 : f32 to vector<8x128xf32>
    %25 = arith.addf %24, %23 : vector<8x128xf32>
    %26 = arith.divf %24, %25 : vector<8x128xf32>
    %27 = vector.extract_strided_slice %20 {offsets = [0, 128], sizes = [8, 128], strides = [1, 1]} : vector<8x512xf32> to vector<8x128xf32>
    %28 = arith.negf %27 : vector<8x128xf32>
    %29 = math.exp %28 : vector<8x128xf32>
    %cst_17 = arith.constant 1.000000e+00 : f32
    %30 = vector.broadcast %cst_17 : f32 to vector<8x128xf32>
    %31 = arith.addf %30, %29 : vector<8x128xf32>
    %32 = arith.divf %30, %31 : vector<8x128xf32>
    %33 = vector.extract_strided_slice %20 {offsets = [0, 256], sizes = [8, 128], strides = [1, 1]} : vector<8x512xf32> to vector<8x128xf32>
    %34 = math.tanh %33 : vector<8x128xf32>
    %35 = vector.extract_strided_slice %20 {offsets = [0, 384], sizes = [8, 128], strides = [1, 1]} : vector<8x512xf32> to vector<8x128xf32>
    %36 = arith.negf %35 : vector<8x128xf32>
    %37 = math.exp %36 : vector<8x128xf32>
    %cst_18 = arith.constant 1.000000e+00 : f32
    %38 = vector.broadcast %cst_18 : f32 to vector<8x128xf32>
    %39 = arith.addf %38, %37 : vector<8x128xf32>
    %40 = arith.divf %38, %39 : vector<8x128xf32>
    %41 = arith.mulf %32, %12 : vector<8x128xf32>
    %42 = arith.mulf %26, %34 : vector<8x128xf32>
    %43 = arith.addf %41, %42 : vector<8x128xf32>
    %44 = math.tanh %43 : vector<8x128xf32>
    %45 = arith.mulf %40, %44 : vector<8x128xf32>
    %46 = arith.index_cast %16 : i32 to index
    %c0_19 = arith.constant 0 : index
    %47 = vector.load %arg9[%46, %c0_19] : memref<64x128xf32, #tpu.memory_space<vmem>>, vector<8x128xf32>
    tpu.vector_store %arg9[%46, %c0_19], %45 {strides = array<i32>} : memref<64x128xf32, #tpu.memory_space<vmem>>, vector<8x128xf32>,
    %c5_i32 = arith.constant 5 : i32
    %48 = arith.muli %arg0, %c5_i32 : i32
    %c1_i32 = arith.constant 1 : i32
    %49 = arith.addi %c1_i32, %48 : i32
    %c8_i32_20 = arith.constant 8 : i32
    %50 = arith.muli %49, %c8_i32_20 : i32
    %51 = tpu.assume_multiple %50, 8 : i32
    %52 = arith.index_cast %51 : i32 to index
    %c0_21 = arith.constant 0 : index
    %53 = vector.load %arg8[%52, %c0_21] : memref<64x512xf32, #tpu.memory_space<vmem>>, vector<8x512xf32>
    %cst_22 = arith.constant dense<0.000000e+00> : vector<8x512xf32>
    %54 = tpu.matmul %45, %10, %cst_22 {dimension_numbers = #tpu.dot_dimension_numbers<[1], [0], [0], [1], [0, 0, 1, 1], [], []>} : vector<8x128xf32>, vector<128x512xf32>, vector<8x512xf32> -> vector<8x512xf32>
    %55 = arith.addf %53, %54 : vector<8x512xf32>
    %56 = vector.extract_strided_slice %55 {offsets = [0, 0], sizes = [8, 128], strides = [1, 1]} : vector<8x512xf32> to vector<8x128xf32>
    %57 = arith.negf %56 : vector<8x128xf32>
    %58 = math.exp %57 : vector<8x128xf32>
    %cst_23 = arith.constant 1.000000e+00 : f32
    %59 = vector.broadcast %cst_23 : f32 to vector<8x128xf32>
    %60 = arith.addf %59, %58 : vector<8x128xf32>
    %61 = arith.divf %59, %60 : vector<8x128xf32>
    %62 = vector.extract_strided_slice %55 {offsets = [0, 128], sizes = [8, 128], strides = [1, 1]} : vector<8x512xf32> to vector<8x128xf32>
    %63 = arith.negf %62 : vector<8x128xf32>
    %64 = math.exp %63 : vector<8x128xf32>
    %cst_24 = arith.constant 1.000000e+00 : f32
    %65 = vector.broadcast %cst_24 : f32 to vector<8x128xf32>
    %66 = arith.addf %65, %64 : vector<8x128xf32>
    %67 = arith.divf %65, %66 : vector<8x128xf32>
    %68 = vector.extract_strided_slice %55 {offsets = [0, 256], sizes = [8, 128], strides = [1, 1]} : vector<8x512xf32> to vector<8x128xf32>
    %69 = math.tanh %68 : vector<8x128xf32>
    %70 = vector.extract_strided_slice %55 {offsets = [0, 384], sizes = [8, 128], strides = [1, 1]} : vector<8x512xf32> to vector<8x128xf32>
    %71 = arith.negf %70 : vector<8x128xf32>
    %72 = math.exp %71 : vector<8x128xf32>
    %cst_25 = arith.constant 1.000000e+00 : f32
    %73 = vector.broadcast %cst_25 : f32 to vector<8x128xf32>
    %74 = arith.addf %73, %72 : vector<8x128xf32>
    %75 = arith.divf %73, %74 : vector<8x128xf32>
    %76 = arith.mulf %67, %43 : vector<8x128xf32>
    %77 = arith.mulf %61, %69 : vector<8x128xf32>
    %78 = arith.addf %76, %77 : vector<8x128xf32>
    %79 = math.tanh %78 : vector<8x128xf32>
    %80 = arith.mulf %75, %79 : vector<8x128xf32>
    %81 = arith.index_cast %51 : i32 to index
    %c0_26 = arith.constant 0 : index
    %82 = vector.load %arg9[%81, %c0_26] : memref<64x128xf32, #tpu.memory_space<vmem>>, vector<8x128xf32>
    tpu.vector_store %arg9[%81, %c0_26], %80 {strides = array<i32>} : memref<64x128xf32, #tpu.memory_space<vmem>>, vector<8x128xf32>,
    %c3_i32 = arith.constant 3 : i32
    %83 = arith.muli %arg0, %c3_i32 : i32
    %c2_i32 = arith.constant 2 : i32
    %84 = arith.addi %c2_i32, %83 : i32
    %c8_i32_27 = arith.constant 8 : i32
    %85 = arith.muli %84, %c8_i32_27 : i32
    %86 = tpu.assume_multiple %85, 8 : i32
    %87 = arith.index_cast %86 : i32 to index
    %c0_28 = arith.constant 0 : index
    %88 = vector.load %arg8[%87, %c0_28] : memref<64x512xf32, #tpu.memory_space<vmem>>, vector<8x512xf32>
    %cst_29 = arith.constant dense<0.000000e+00> : vector<8x512xf32>
    %89 = tpu.matmul %80, %10, %cst_29 {dimension_numbers = #tpu.dot_dimension_numbers<[1], [0], [0], [1], [0, 0, 1, 1], [], []>} : vector<8x128xf32>, vector<128x512xf32>, vector<8x512xf32> -> vector<8x512xf32>
    %90 = arith.addf %88, %89 : vector<8x512xf32>
    %91 = vector.extract_strided_slice %90 {offsets = [0, 0], sizes = [8, 128], strides = [1, 1]} : vector<8x512xf32> to vector<8x128xf32>
    %92 = arith.negf %91 : vector<8x128xf32>
    %93 = math.exp %92 : vector<8x128xf32>
    %cst_30 = arith.constant 1.000000e+00 : f32
    %94 = vector.broadcast %cst_30 : f32 to vector<8x128xf32>
    %95 = arith.addf %94, %93 : vector<8x128xf32>
    %96 = arith.divf %94, %95 : vector<8x128xf32>
    %97 = vector.extract_strided_slice %90 {offsets = [0, 128], sizes = [8, 128], strides = [1, 1]} : vector<8x512xf32> to vector<8x128xf32>
    %98 = arith.negf %97 : vector<8x128xf32>
    %99 = math.exp %98 : vector<8x128xf32>
    %cst_31 = arith.constant 1.000000e+00 : f32
    %100 = vector.broadcast %cst_31 : f32 to vector<8x128xf32>
    %101 = arith.addf %100, %99 : vector<8x128xf32>
    %102 = arith.divf %100, %101 : vector<8x128xf32>
    %103 = vector.extract_strided_slice %90 {offsets = [0, 256], sizes = [8, 128], strides = [1, 1]} : vector<8x512xf32> to vector<8x128xf32>
    %104 = math.tanh %103 : vector<8x128xf32>
    %105 = vector.extract_strided_slice %90 {offsets = [0, 384], sizes = [8, 128], strides = [1, 1]} : vector<8x512xf32> to vector<8x128xf32>
    %106 = arith.negf %105 : vector<8x128xf32>
    %107 = math.exp %106 : vector<8x128xf32>
    %cst_32 = arith.constant 1.000000e+00 : f32
    %108 = vector.broadcast %cst_32 : f32 to vector<8x128xf32>
    %109 = arith.addf %108, %107 : vector<8x128xf32>
    %110 = arith.divf %108, %109 : vector<8x128xf32>
    %111 = arith.mulf %102, %78 : vector<8x128xf32>
    %112 = arith.mulf %96, %104 : vector<8x128xf32>
    %113 = arith.addf %111, %112 : vector<8x128xf32>
    %114 = math.tanh %113 : vector<8x128xf32>
    %115 = arith.mulf %110, %114 : vector<8x128xf32>
    %116 = arith.index_cast %86 : i32 to index
    %c0_33 = arith.constant 0 : index
    %117 = vector.load %arg9[%116, %c0_33] : memref<64x128xf32, #tpu.memory_space<vmem>>, vector<8x128xf32>
    tpu.vector_store %arg9[%116, %c0_33], %115 {strides = array<i32>} : memref<64x128xf32, #tpu.memory_space<vmem>>, vector<8x128xf32>,
    %c1_i32_34 = arith.constant 1 : i32
    %118 = arith.muli %arg0, %c1_i32_34 : i32
    %c3_i32_35 = arith.constant 3 : i32
    %119 = arith.addi %c3_i32_35, %118 : i32
    %c8_i32_36 = arith.constant 8 : i32
    %120 = arith.muli %119, %c8_i32_36 : i32
    %121 = tpu.assume_multiple %120, 8 : i32
    %122 = arith.index_cast %121 : i32 to index
    %c0_37 = arith.constant 0 : index
    %123 = vector.load %arg8[%122, %c0_37] : memref<64x512xf32, #tpu.memory_space<vmem>>, vector<8x512xf32>
    %cst_38 = arith.constant dense<0.000000e+00> : vector<8x512xf32>
    %124 = tpu.matmul %115, %10, %cst_38 {dimension_numbers = #tpu.dot_dimension_numbers<[1], [0], [0], [1], [0, 0, 1, 1], [], []>} : vector<8x128xf32>, vector<128x512xf32>, vector<8x512xf32> -> vector<8x512xf32>
    %125 = arith.addf %123, %124 : vector<8x512xf32>
    %126 = vector.extract_strided_slice %125 {offsets = [0, 0], sizes = [8, 128], strides = [1, 1]} : vector<8x512xf32> to vector<8x128xf32>
    %127 = arith.negf %126 : vector<8x128xf32>
    %128 = math.exp %127 : vector<8x128xf32>
    %cst_39 = arith.constant 1.000000e+00 : f32
    %129 = vector.broadcast %cst_39 : f32 to vector<8x128xf32>
    %130 = arith.addf %129, %128 : vector<8x128xf32>
    %131 = arith.divf %129, %130 : vector<8x128xf32>
    %132 = vector.extract_strided_slice %125 {offsets = [0, 128], sizes = [8, 128], strides = [1, 1]} : vector<8x512xf32> to vector<8x128xf32>
    %133 = arith.negf %132 : vector<8x128xf32>
    %134 = math.exp %133 : vector<8x128xf32>
    %cst_40 = arith.constant 1.000000e+00 : f32
    %135 = vector.broadcast %cst_40 : f32 to vector<8x128xf32>
    %136 = arith.addf %135, %134 : vector<8x128xf32>
    %137 = arith.divf %135, %136 : vector<8x128xf32>
    %138 = vector.extract_strided_slice %125 {offsets = [0, 256], sizes = [8, 128], strides = [1, 1]} : vector<8x512xf32> to vector<8x128xf32>
    %139 = math.tanh %138 : vector<8x128xf32>
    %140 = vector.extract_strided_slice %125 {offsets = [0, 384], sizes = [8, 128], strides = [1, 1]} : vector<8x512xf32> to vector<8x128xf32>
    %141 = arith.negf %140 : vector<8x128xf32>
    %142 = math.exp %141 : vector<8x128xf32>
    %cst_41 = arith.constant 1.000000e+00 : f32
    %143 = vector.broadcast %cst_41 : f32 to vector<8x128xf32>
    %144 = arith.addf %143, %142 : vector<8x128xf32>
    %145 = arith.divf %143, %144 : vector<8x128xf32>
    %146 = arith.mulf %137, %113 : vector<8x128xf32>
    %147 = arith.mulf %131, %139 : vector<8x128xf32>
    %148 = arith.addf %146, %147 : vector<8x128xf32>
    %149 = math.tanh %148 : vector<8x128xf32>
    %150 = arith.mulf %145, %149 : vector<8x128xf32>
    %151 = arith.index_cast %121 : i32 to index
    %c0_42 = arith.constant 0 : index
    %152 = vector.load %arg9[%151, %c0_42] : memref<64x128xf32, #tpu.memory_space<vmem>>, vector<8x128xf32>
    tpu.vector_store %arg9[%151, %c0_42], %150 {strides = array<i32>} : memref<64x128xf32, #tpu.memory_space<vmem>>, vector<8x128xf32>,
    %c-1_i32 = arith.constant -1 : i32
    %153 = arith.muli %arg0, %c-1_i32 : i32
    %c4_i32 = arith.constant 4 : i32
    %154 = arith.addi %c4_i32, %153 : i32
    %c8_i32_43 = arith.constant 8 : i32
    %155 = arith.muli %154, %c8_i32_43 : i32
    %156 = tpu.assume_multiple %155, 8 : i32
    %157 = arith.index_cast %156 : i32 to index
    %c0_44 = arith.constant 0 : index
    %158 = vector.load %arg8[%157, %c0_44] : memref<64x512xf32, #tpu.memory_space<vmem>>, vector<8x512xf32>
    %cst_45 = arith.constant dense<0.000000e+00> : vector<8x512xf32>
    %159 = tpu.matmul %150, %10, %cst_45 {dimension_numbers = #tpu.dot_dimension_numbers<[1], [0], [0], [1], [0, 0, 1, 1], [], []>} : vector<8x128xf32>, vector<128x512xf32>, vector<8x512xf32> -> vector<8x512xf32>
    %160 = arith.addf %158, %159 : vector<8x512xf32>
    %161 = vector.extract_strided_slice %160 {offsets = [0, 0], sizes = [8, 128], strides = [1, 1]} : vector<8x512xf32> to vector<8x128xf32>
    %162 = arith.negf %161 : vector<8x128xf32>
    %163 = math.exp %162 : vector<8x128xf32>
    %cst_46 = arith.constant 1.000000e+00 : f32
    %164 = vector.broadcast %cst_46 : f32 to vector<8x128xf32>
    %165 = arith.addf %164, %163 : vector<8x128xf32>
    %166 = arith.divf %164, %165 : vector<8x128xf32>
    %167 = vector.extract_strided_slice %160 {offsets = [0, 128], sizes = [8, 128], strides = [1, 1]} : vector<8x512xf32> to vector<8x128xf32>
    %168 = arith.negf %167 : vector<8x128xf32>
    %169 = math.exp %168 : vector<8x128xf32>
    %cst_47 = arith.constant 1.000000e+00 : f32
    %170 = vector.broadcast %cst_47 : f32 to vector<8x128xf32>
    %171 = arith.addf %170, %169 : vector<8x128xf32>
    %172 = arith.divf %170, %171 : vector<8x128xf32>
    %173 = vector.extract_strided_slice %160 {offsets = [0, 256], sizes = [8, 128], strides = [1, 1]} : vector<8x512xf32> to vector<8x128xf32>
    %174 = math.tanh %173 : vector<8x128xf32>
    %175 = vector.extract_strided_slice %160 {offsets = [0, 384], sizes = [8, 128], strides = [1, 1]} : vector<8x512xf32> to vector<8x128xf32>
    %176 = arith.negf %175 : vector<8x128xf32>
    %177 = math.exp %176 : vector<8x128xf32>
    %cst_48 = arith.constant 1.000000e+00 : f32
    %178 = vector.broadcast %cst_48 : f32 to vector<8x128xf32>
    %179 = arith.addf %178, %177 : vector<8x128xf32>
    %180 = arith.divf %178, %179 : vector<8x128xf32>
    %181 = arith.mulf %172, %148 : vector<8x128xf32>
    %182 = arith.mulf %166, %174 : vector<8x128xf32>
    %183 = arith.addf %181, %182 : vector<8x128xf32>
    %184 = math.tanh %183 : vector<8x128xf32>
    %185 = arith.mulf %180, %184 : vector<8x128xf32>
    %186 = arith.index_cast %156 : i32 to index
    %c0_49 = arith.constant 0 : index
    %187 = vector.load %arg9[%186, %c0_49] : memref<64x128xf32, #tpu.memory_space<vmem>>, vector<8x128xf32>
    tpu.vector_store %arg9[%186, %c0_49], %185 {strides = array<i32>} : memref<64x128xf32, #tpu.memory_space<vmem>>, vector<8x128xf32>,
    %c-3_i32 = arith.constant -3 : i32
    %188 = arith.muli %arg0, %c-3_i32 : i32
    %c5_i32_50 = arith.constant 5 : i32
    %189 = arith.addi %c5_i32_50, %188 : i32
    %c8_i32_51 = arith.constant 8 : i32
    %190 = arith.muli %189, %c8_i32_51 : i32
    %191 = tpu.assume_multiple %190, 8 : i32
    %192 = arith.index_cast %191 : i32 to index
    %c0_52 = arith.constant 0 : index
    %193 = vector.load %arg8[%192, %c0_52] : memref<64x512xf32, #tpu.memory_space<vmem>>, vector<8x512xf32>
    %cst_53 = arith.constant dense<0.000000e+00> : vector<8x512xf32>
    %194 = tpu.matmul %185, %10, %cst_53 {dimension_numbers = #tpu.dot_dimension_numbers<[1], [0], [0], [1], [0, 0, 1, 1], [], []>} : vector<8x128xf32>, vector<128x512xf32>, vector<8x512xf32> -> vector<8x512xf32>
    %195 = arith.addf %193, %194 : vector<8x512xf32>
    %196 = vector.extract_strided_slice %195 {offsets = [0, 0], sizes = [8, 128], strides = [1, 1]} : vector<8x512xf32> to vector<8x128xf32>
    %197 = arith.negf %196 : vector<8x128xf32>
    %198 = math.exp %197 : vector<8x128xf32>
    %cst_54 = arith.constant 1.000000e+00 : f32
    %199 = vector.broadcast %cst_54 : f32 to vector<8x128xf32>
    %200 = arith.addf %199, %198 : vector<8x128xf32>
    %201 = arith.divf %199, %200 : vector<8x128xf32>
    %202 = vector.extract_strided_slice %195 {offsets = [0, 128], sizes = [8, 128], strides = [1, 1]} : vector<8x512xf32> to vector<8x128xf32>
    %203 = arith.negf %202 : vector<8x128xf32>
    %204 = math.exp %203 : vector<8x128xf32>
    %cst_55 = arith.constant 1.000000e+00 : f32
    %205 = vector.broadcast %cst_55 : f32 to vector<8x128xf32>
    %206 = arith.addf %205, %204 : vector<8x128xf32>
    %207 = arith.divf %205, %206 : vector<8x128xf32>
    %208 = vector.extract_strided_slice %195 {offsets = [0, 256], sizes = [8, 128], strides = [1, 1]} : vector<8x512xf32> to vector<8x128xf32>
    %209 = math.tanh %208 : vector<8x128xf32>
    %210 = vector.extract_strided_slice %195 {offsets = [0, 384], sizes = [8, 128], strides = [1, 1]} : vector<8x512xf32> to vector<8x128xf32>
    %211 = arith.negf %210 : vector<8x128xf32>
    %212 = math.exp %211 : vector<8x128xf32>
    %cst_56 = arith.constant 1.000000e+00 : f32
    %213 = vector.broadcast %cst_56 : f32 to vector<8x128xf32>
    %214 = arith.addf %213, %212 : vector<8x128xf32>
    %215 = arith.divf %213, %214 : vector<8x128xf32>
    %216 = arith.mulf %207, %183 : vector<8x128xf32>
    %217 = arith.mulf %201, %209 : vector<8x128xf32>
    %218 = arith.addf %216, %217 : vector<8x128xf32>
    %219 = math.tanh %218 : vector<8x128xf32>
    %220 = arith.mulf %215, %219 : vector<8x128xf32>
    %221 = arith.index_cast %191 : i32 to index
    %c0_57 = arith.constant 0 : index
    %222 = vector.load %arg9[%221, %c0_57] : memref<64x128xf32, #tpu.memory_space<vmem>>, vector<8x128xf32>
    tpu.vector_store %arg9[%221, %c0_57], %220 {strides = array<i32>} : memref<64x128xf32, #tpu.memory_space<vmem>>, vector<8x128xf32>,
    %c-5_i32 = arith.constant -5 : i32
    %223 = arith.muli %arg0, %c-5_i32 : i32
    %c6_i32 = arith.constant 6 : i32
    %224 = arith.addi %c6_i32, %223 : i32
    %c8_i32_58 = arith.constant 8 : i32
    %225 = arith.muli %224, %c8_i32_58 : i32
    %226 = tpu.assume_multiple %225, 8 : i32
    %227 = arith.index_cast %226 : i32 to index
    %c0_59 = arith.constant 0 : index
    %228 = vector.load %arg8[%227, %c0_59] : memref<64x512xf32, #tpu.memory_space<vmem>>, vector<8x512xf32>
    %cst_60 = arith.constant dense<0.000000e+00> : vector<8x512xf32>
    %229 = tpu.matmul %220, %10, %cst_60 {dimension_numbers = #tpu.dot_dimension_numbers<[1], [0], [0], [1], [0, 0, 1, 1], [], []>} : vector<8x128xf32>, vector<128x512xf32>, vector<8x512xf32> -> vector<8x512xf32>
    %230 = arith.addf %228, %229 : vector<8x512xf32>
    %231 = vector.extract_strided_slice %230 {offsets = [0, 0], sizes = [8, 128], strides = [1, 1]} : vector<8x512xf32> to vector<8x128xf32>
    %232 = arith.negf %231 : vector<8x128xf32>
    %233 = math.exp %232 : vector<8x128xf32>
    %cst_61 = arith.constant 1.000000e+00 : f32
    %234 = vector.broadcast %cst_61 : f32 to vector<8x128xf32>
    %235 = arith.addf %234, %233 : vector<8x128xf32>
    %236 = arith.divf %234, %235 : vector<8x128xf32>
    %237 = vector.extract_strided_slice %230 {offsets = [0, 128], sizes = [8, 128], strides = [1, 1]} : vector<8x512xf32> to vector<8x128xf32>
    %238 = arith.negf %237 : vector<8x128xf32>
    %239 = math.exp %238 : vector<8x128xf32>
    %cst_62 = arith.constant 1.000000e+00 : f32
    %240 = vector.broadcast %cst_62 : f32 to vector<8x128xf32>
    %241 = arith.addf %240, %239 : vector<8x128xf32>
    %242 = arith.divf %240, %241 : vector<8x128xf32>
    %243 = vector.extract_strided_slice %230 {offsets = [0, 256], sizes = [8, 128], strides = [1, 1]} : vector<8x512xf32> to vector<8x128xf32>
    %244 = math.tanh %243 : vector<8x128xf32>
    %245 = vector.extract_strided_slice %230 {offsets = [0, 384], sizes = [8, 128], strides = [1, 1]} : vector<8x512xf32> to vector<8x128xf32>
    %246 = arith.negf %245 : vector<8x128xf32>
    %247 = math.exp %246 : vector<8x128xf32>
    %cst_63 = arith.constant 1.000000e+00 : f32
    %248 = vector.broadcast %cst_63 : f32 to vector<8x128xf32>
    %249 = arith.addf %248, %247 : vector<8x128xf32>
    %250 = arith.divf %248, %249 : vector<8x128xf32>
    %251 = arith.mulf %242, %218 : vector<8x128xf32>
    %252 = arith.mulf %236, %244 : vector<8x128xf32>
    %253 = arith.addf %251, %252 : vector<8x128xf32>
    %254 = math.tanh %253 : vector<8x128xf32>
    %255 = arith.mulf %250, %254 : vector<8x128xf32>
    %256 = arith.index_cast %226 : i32 to index
    %c0_64 = arith.constant 0 : index
    %257 = vector.load %arg9[%256, %c0_64] : memref<64x128xf32, #tpu.memory_space<vmem>>, vector<8x128xf32>
    tpu.vector_store %arg9[%256, %c0_64], %255 {strides = array<i32>} : memref<64x128xf32, #tpu.memory_space<vmem>>, vector<8x128xf32>,
    %c-7_i32 = arith.constant -7 : i32
    %258 = arith.muli %arg0, %c-7_i32 : i32
    %c7_i32_65 = arith.constant 7 : i32
    %259 = arith.addi %c7_i32_65, %258 : i32
    %c8_i32_66 = arith.constant 8 : i32
    %260 = arith.muli %259, %c8_i32_66 : i32
    %261 = tpu.assume_multiple %260, 8 : i32
    %262 = arith.index_cast %261 : i32 to index
    %c0_67 = arith.constant 0 : index
    %263 = vector.load %arg8[%262, %c0_67] : memref<64x512xf32, #tpu.memory_space<vmem>>, vector<8x512xf32>
    %cst_68 = arith.constant dense<0.000000e+00> : vector<8x512xf32>
    %264 = tpu.matmul %255, %10, %cst_68 {dimension_numbers = #tpu.dot_dimension_numbers<[1], [0], [0], [1], [0, 0, 1, 1], [], []>} : vector<8x128xf32>, vector<128x512xf32>, vector<8x512xf32> -> vector<8x512xf32>
    %265 = arith.addf %263, %264 : vector<8x512xf32>
    %266 = vector.extract_strided_slice %265 {offsets = [0, 0], sizes = [8, 128], strides = [1, 1]} : vector<8x512xf32> to vector<8x128xf32>
    %267 = arith.negf %266 : vector<8x128xf32>
    %268 = math.exp %267 : vector<8x128xf32>
    %cst_69 = arith.constant 1.000000e+00 : f32
    %269 = vector.broadcast %cst_69 : f32 to vector<8x128xf32>
    %270 = arith.addf %269, %268 : vector<8x128xf32>
    %271 = arith.divf %269, %270 : vector<8x128xf32>
    %272 = vector.extract_strided_slice %265 {offsets = [0, 128], sizes = [8, 128], strides = [1, 1]} : vector<8x512xf32> to vector<8x128xf32>
    %273 = arith.negf %272 : vector<8x128xf32>
    %274 = math.exp %273 : vector<8x128xf32>
    %cst_70 = arith.constant 1.000000e+00 : f32
    %275 = vector.broadcast %cst_70 : f32 to vector<8x128xf32>
    %276 = arith.addf %275, %274 : vector<8x128xf32>
    %277 = arith.divf %275, %276 : vector<8x128xf32>
    %278 = vector.extract_strided_slice %265 {offsets = [0, 256], sizes = [8, 128], strides = [1, 1]} : vector<8x512xf32> to vector<8x128xf32>
    %279 = math.tanh %278 : vector<8x128xf32>
    %280 = vector.extract_strided_slice %265 {offsets = [0, 384], sizes = [8, 128], strides = [1, 1]} : vector<8x512xf32> to vector<8x128xf32>
    %281 = arith.negf %280 : vector<8x128xf32>
    %282 = math.exp %281 : vector<8x128xf32>
    %cst_71 = arith.constant 1.000000e+00 : f32
    %283 = vector.broadcast %cst_71 : f32 to vector<8x128xf32>
    %284 = arith.addf %283, %282 : vector<8x128xf32>
    %285 = arith.divf %283, %284 : vector<8x128xf32>
    %286 = arith.mulf %277, %253 : vector<8x128xf32>
    %287 = arith.mulf %271, %279 : vector<8x128xf32>
    %288 = arith.addf %286, %287 : vector<8x128xf32>
    %289 = math.tanh %288 : vector<8x128xf32>
    %290 = arith.mulf %285, %289 : vector<8x128xf32>
    %291 = arith.index_cast %261 : i32 to index
    %c0_72 = arith.constant 0 : index
    %292 = vector.load %arg9[%291, %c0_72] : memref<64x128xf32, #tpu.memory_space<vmem>>, vector<8x128xf32>
    tpu.vector_store %arg9[%291, %c0_72], %290 {strides = array<i32>} : memref<64x128xf32, #tpu.memory_space<vmem>>, vector<8x128xf32>,
    %c0_73 = arith.constant 0 : index
    %c0_74 = arith.constant 0 : index
    %293 = vector.load %arg9[%c0_73, %c0_74] : memref<64x128xf32, #tpu.memory_space<vmem>>, vector<64x128xf32>
    %c0_75 = arith.constant 0 : index
    %c0_76 = arith.constant 0 : index
    %c0_77 = arith.constant 0 : index
    %294 = vector.load %arg5[%c0_75, %c0_76, %c0_77] : memref<1x128x128xf32, #tpu.memory_space<vmem>>, vector<1x128x128xf32>
    %295 = vector.shape_cast %294 : vector<1x128x128xf32> to vector<128x128xf32>
    %cst_78 = arith.constant dense<0.000000e+00> : vector<64x128xf32>
    %296 = tpu.matmul %293, %295, %cst_78 {dimension_numbers = #tpu.dot_dimension_numbers<[1], [0], [0], [1], [0, 0, 1, 1], [], []>} : vector<64x128xf32>, vector<128x128xf32>, vector<64x128xf32> -> vector<64x128xf32>
    %c0_79 = arith.constant 0 : index
    %c0_80 = arith.constant 0 : index
    %c0_81 = arith.constant 0 : index
    %297 = vector.load %arg6[%c0_79, %c0_80, %c0_81] : memref<1x1x128xf32, #tpu.memory_space<vmem>>, vector<1x1x128xf32>
    %298 = vector.shape_cast %297 : vector<1x1x128xf32> to vector<1x128xf32>
    %299 = vector.broadcast %298 : vector<1x128xf32> to vector<64x128xf32>
    %300 = arith.addf %296, %299 : vector<64x128xf32>
    %c0_i32_82 = arith.constant 0 : i32
    %301 = arith.cmpi eq, %arg0, %c0_i32_82 : i32
    %302 = arith.extui %301 : i1 to i32
    %c0_i32_83 = arith.constant 0 : i32
    %303 = arith.cmpi ne, %302, %c0_i32_83 : i32
    scf.if %303 {
      %c0_86 = arith.constant 0 : index
      %c0_87 = arith.constant 0 : index
      %307 = vector.load %arg7[%c0_86, %c0_87] : memref<64x128xf32, #tpu.memory_space<vmem>>, vector<64x128xf32>
      tpu.vector_store %arg7[%c0_86, %c0_87], %300 {strides = array<i32>} : memref<64x128xf32, #tpu.memory_space<vmem>>, vector<64x128xf32>,
    } else {
    }
    %c1_i32_84 = arith.constant 1 : i32
    %304 = arith.cmpi eq, %arg0, %c1_i32_84 : i32
    %305 = arith.extui %304 : i1 to i32
    %c0_i32_85 = arith.constant 0 : i32
    %306 = arith.cmpi ne, %305, %c0_i32_85 : i32
    scf.if %306 {
      %c0_86 = arith.constant 0 : index
      %c0_87 = arith.constant 0 : index
      %307 = vector.load %arg7[%c0_86, %c0_87] : memref<64x128xf32, #tpu.memory_space<vmem>>, vector<64x128xf32>
      %308 = arith.addf %307, %300 : vector<64x128xf32>
      %c0_88 = arith.constant 0 : index
      %c0_89 = arith.constant 0 : index
      %309 = vector.load %arg7[%c0_88, %c0_89] : memref<64x128xf32, #tpu.memory_space<vmem>>, vector<64x128xf32>
      tpu.vector_store %arg7[%c0_88, %c0_89], %308 {strides = array<i32>} : memref<64x128xf32, #tpu.memory_space<vmem>>, vector<64x128xf32>,
    } else {
    }
    return
  }
  func.func @transform_0(%arg0: i32) -> (i32, i32) {
    %c0_i32 = arith.constant 0 : i32
    %c0_i32_0 = arith.constant 0 : i32
    %c0_i32_1 = arith.constant 0 : i32
    return %c0_i32, %c0_i32_0 : i32, i32
  }
  func.func @transform_1(%arg0: i32) -> (i32, i32, i32) {
    %c0_i32 = arith.constant 0 : i32
    %c0_i32_0 = arith.constant 0 : i32
    %c0_i32_1 = arith.constant 0 : i32
    return %arg0, %c0_i32, %c0_i32_0 : i32, i32, i32
  }
  func.func @transform_2(%arg0: i32) -> (i32, i32, i32) {
    %c0_i32 = arith.constant 0 : i32
    %c0_i32_0 = arith.constant 0 : i32
    %c0_i32_1 = arith.constant 0 : i32
    return %arg0, %c0_i32, %c0_i32_0 : i32, i32, i32
  }
  func.func @transform_3(%arg0: i32) -> (i32, i32, i32) {
    %c0_i32 = arith.constant 0 : i32
    %c0_i32_0 = arith.constant 0 : i32
    %c0_i32_1 = arith.constant 0 : i32
    return %arg0, %c0_i32, %c0_i32_0 : i32, i32, i32
  }
  func.func @transform_4(%arg0: i32) -> (i32, i32, i32) {
    %c0_i32 = arith.constant 0 : i32
    %c0_i32_0 = arith.constant 0 : i32
    %c0_i32_1 = arith.constant 0 : i32
    return %arg0, %c0_i32, %c0_i32_0 : i32, i32, i32
  }
  func.func @transform_5(%arg0: i32) -> (i32, i32, i32) {
    %c0_i32 = arith.constant 0 : i32
    %c0_i32_0 = arith.constant 0 : i32
    %c0_i32_1 = arith.constant 0 : i32
    return %arg0, %c0_i32, %c0_i32_0 : i32, i32, i32
  }
  func.func @transform_6(%arg0: i32) -> (i32, i32) {
    %c0_i32 = arith.constant 0 : i32
    %c0_i32_0 = arith.constant 0 : i32
    %c0_i32_1 = arith.constant 0 : i32
    return %c0_i32, %c0_i32_0 : i32, i32
  }
}

</mosaic_0001>

<llo_original>
// kernel: tpu_custom_call.1
$region0: #{tpu_custom_call.1}
  #allocation0 [shape = 'u32[]', space=smem, size = 0x4, offset = 0x4, fixed_abs, tag = 'smem constant byte address 0x4 - core index']
  #allocation1 [shape = 'u32[144,128]{1,0:T(1,128)}', space=vmem, size = 0x12000, scoped, tag = 'internal scratch']
  #allocation2 [shape = 'f32[64,512]{1,0:T(8,128)}', space=vmem, size = 0x20000, scoped, tag = 'scratch operand']
  #allocation3 [shape = 'f32[64,128]{1,0:T(8,128)}', space=vmem, size = 0x8000, scoped, tag = 'scratch operand']
  %s0 = inlined_call_operand.vmem [shape: f32[64,16], index: 0, kind: input, shape index: {}]
  %s1 = inlined_call_operand.hbm [shape: f32[2,16,512], index: 1, kind: input, shape index: {}]
  %s2 = inlined_call_operand.hbm [shape: f32[2,128,512], index: 2, kind: input, shape index: {}]
  %s3 = inlined_call_operand.vmem [shape: f32[2,1,512], index: 3, kind: input, shape index: {}]
  %s4 = inlined_call_operand.hbm [shape: f32[2,128,128], index: 4, kind: input, shape index: {}]
  %s5 = inlined_call_operand.vmem [shape: f32[2,1,128], index: 5, kind: input, shape index: {}]
  %s6 = inlined_call_operand.hbm [shape: f32[64,128], index: 6, kind: output, shape index: {}]
  %s7 = sld [smem:[#allocation0]]
  $region77: #{tpu_custom_call.1} parent=0
    _
  %s9 = ssub.s32 1, %s7
  %s10 = scalar_select 0, %s9, %s7
  $region1: #{tpu_custom_call.1} parent=0
    #allocation4 [shape = 'u8[65536]{0}', space=vmem, size = 0x10000, scoped, tag = 'input window, operand 1']
    #allocation5 [shape = 's32[2]{0}', space=sflag, size = 0x8, scoped, tag = 'scoped memory for tpu_custom_call.1']
    #allocation6 [shape = 's32[2]{0}', space=sflag, size = 0x8, scoped, tag = 'scoped memory for tpu_custom_call.1']
    #allocation7 [shape = 'u8[524288]{0}', space=vmem, size = 0x80000, scoped, tag = 'input window, operand 2']
    #allocation8 [shape = 's32[2]{0}', space=sflag, size = 0x8, scoped, tag = 'scoped memory for tpu_custom_call.1']
    #allocation9 [shape = 'u8[131072]{0}', space=vmem, size = 0x20000, scoped, tag = 'input window, operand 4']
    #allocation10 [shape = 'u8[32768]{0}', space=vmem, size = 0x8000, scoped, tag = 'output window, operand 0, single buffered']
    %11 = vsyncpa [#allocation5], 0
    %s12 = scalar_lea.sflag [#allocation5], 1
    %13 = vsyncpa %s12, 0
    %14 = vsyncpa [#allocation8], 0
    %s15 = scalar_lea.sflag [#allocation8], 1
    %16 = vsyncpa %s15, 0
    %17 = vsyncpa [#allocation6], 0
    loop: start=0, step=1, limit=4
    $region2: #{tpu_custom_call.1} parent=1 // loop_pre_header
      _
    $region3: #{tpu_custom_call.1} parent=1 // loop_header
      %s19 = sphi 0, %s23
      %p20 = scmp.ge.s32.totalorder %s19, 4
      %s27 = sphi 0, %s27
      %s29 = sphi 0, %s27
      %s30 = sphi 0, %s29
      %s44 = sphi 0, %s30
      %s50 = sphi 0, %s52
      %s53 = sphi 0, %s50
      %s54 = sphi 0, %s53
      %s70 = sphi 0, %s54
      %s76 = sphi 0, %s78
      %s79 = sphi 0, %s76
      %s80 = sphi 0, %s79
      %s96 = sphi 0, %s80
      %s102 = sphi 0, %s104
      %s105 = sphi 0, %s102
      %s106 = sphi 0, %s105
      %s122 = sphi 0, %s106
      %s128 = sphi 0, %s130
      %s131 = sphi 0, %s128
      %s132 = sphi 0, %s131
      %s148 = sphi 0, %s132
      %s154 = sphi 0, %s156
      %s157 = sphi 0, %s154
      %s158 = sphi 0, %s157
      %s174 = sphi 0, %s158
      %s178 = sphi 0, %s178
      %s180 = sphi 0, %s178
      %s181 = sphi 0, %s180
      %s195 = sphi 0, %s181
    $region4: #{tpu_custom_call.1} parent=1 // loop_header_branch
      %22 = sbr.rel (%p20) target = $region8
    $region5: #{tpu_custom_call.1} parent=1 // loop_body
      %s24 = ssub.s32 %s19, 1
      %s25 = ssub.s32 %s19, 2
      %s26 = sadd.s32 %s19, 1
      %s28 = sadd.s32 %s27, 1
      %p31 = scmp.eq.s32.totalorder %s19, 1
      %p32 = scmp.ne.s32.totalorder %s27, %s29
      %p33 = scmp.eq.s32.totalorder %s19, 0
      %p34 = por %p32, %p33
      %p35 = scmp.ne.s32.totalorder %s27, %s29
      %p36 = scmp.eq.s32.totalorder %s24, 1
      %p37 = por %p35, %p36
      %p38 = scmp.ne.s32.totalorder %s29, %s30
      %p39 = scmp.eq.s32.totalorder %s24, 0
      %p40 = por %p38, %p39
      %p41 = scmp.ne.s32.totalorder %s29, %s30
      %p42 = scmp.eq.s32.totalorder %s25, 1
      %p43 = por %p41, %p42
      %p45 = scmp.ne.s32.totalorder %s30, %s44
      %p46 = scmp.eq.s32.totalorder %s25, 0
      %p47 = por %p45, %p46
      %s48 = ssub.s32 %s19, %s26
      %p49 = scmp.eq.s32.totalorder %s48, 0
      %s51 = sadd.s32 %s50, 1
      %s52 = scalar_select %p49, %s50, %s51
      %p55 = pneg %p49
      %p56 = scmp.eq.s32.totalorder %s19, 1
      %p57 = por %p55, %p56
      %p58 = scmp.ne.s32.totalorder %s50, %s53
      %p59 = scmp.eq.s32.totalorder %s19, 0
      %p60 = por %p58, %p59
      %p61 = scmp.ne.s32.totalorder %s50, %s53
      %p62 = scmp.eq.s32.totalorder %s24, 1
      %p63 = por %p61, %p62
      %p64 = scmp.ne.s32.totalorder %s53, %s54
      %p65 = scmp.eq.s32.totalorder %s24, 0
      %p66 = por %p64, %p65
      %p67 = scmp.ne.s32.totalorder %s53, %s54
      %p68 = scmp.eq.s32.totalorder %s25, 1
      %p69 = por %p67, %p68
      %p71 = scmp.ne.s32.totalorder %s54, %s70
      %p72 = scmp.eq.s32.totalorder %s25, 0
      %p73 = por %p71, %p72
      %s74 = ssub.s32 %s19, %s26
      %p75 = scmp.eq.s32.totalorder %s74, 0
      %s77 = sadd.s32 %s76, 1
      %s78 = scalar_select %p75, %s76, %s77
      %p81 = pneg %p75
      %p82 = scmp.eq.s32.totalorder %s19, 1
      %p83 = por %p81, %p82
      %p84 = scmp.ne.s32.totalorder %s76, %s79
      %p85 = scmp.eq.s32.totalorder %s19, 0
      %p86 = por %p84, %p85
      %p87 = scmp.ne.s32.totalorder %s76, %s79
      %p88 = scmp.eq.s32.totalorder %s24, 1
      %p89 = por %p87, %p88
      %p90 = scmp.ne.s32.totalorder %s79, %s80
      %p91 = scmp.eq.s32.totalorder %s24, 0
      %p92 = por %p90, %p91
      %p93 = scmp.ne.s32.totalorder %s79, %s80
      %p94 = scmp.eq.s32.totalorder %s25, 1
      %p95 = por %p93, %p94
      %p97 = scmp.ne.s32.totalorder %s80, %s96
      %p98 = scmp.eq.s32.totalorder %s25, 0
      %p99 = por %p97, %p98
      %s100 = ssub.s32 %s19, %s26
      %p101 = scmp.eq.s32.totalorder %s100, 0
      %s103 = sadd.s32 %s102, 1
      %s104 = scalar_select %p101, %s102, %s103
      %p107 = pneg %p101
      %p108 = scmp.eq.s32.totalorder %s19, 1
      %p109 = por %p107, %p108
      %p110 = scmp.ne.s32.totalorder %s102, %s105
      %p111 = scmp.eq.s32.totalorder %s19, 0
      %p112 = por %p110, %p111
      %p113 = scmp.ne.s32.totalorder %s102, %s105
      %p114 = scmp.eq.s32.totalorder %s24, 1
      %p115 = por %p113, %p114
      %p116 = scmp.ne.s32.totalorder %s105, %s106
      %p117 = scmp.eq.s32.totalorder %s24, 0
      %p118 = por %p116, %p117
      %p119 = scmp.ne.s32.totalorder %s105, %s106
      %p120 = scmp.eq.s32.totalorder %s25, 1
      %p121 = por %p119, %p120
      %p123 = scmp.ne.s32.totalorder %s106, %s122
      %p124 = scmp.eq.s32.totalorder %s25, 0
      %p125 = por %p123, %p124
      %s126 = ssub.s32 %s19, %s26
      %p127 = scmp.eq.s32.totalorder %s126, 0
      %s129 = sadd.s32 %s128, 1
      %s130 = scalar_select %p127, %s128, %s129
      %p133 = pneg %p127
      %p134 = scmp.eq.s32.totalorder %s19, 1
      %p135 = por %p133, %p134
      %p136 = scmp.ne.s32.totalorder %s128, %s131
      %p137 = scmp.eq.s32.totalorder %s19, 0
      %p138 = por %p136, %p137
      %p139 = scmp.ne.s32.totalorder %s128, %s131
      %p140 = scmp.eq.s32.totalorder %s24, 1
      %p141 = por %p139, %p140
      %p142 = scmp.ne.s32.totalorder %s131, %s132
      %p143 = scmp.eq.s32.totalorder %s24, 0
      %p144 = por %p142, %p143
      %p145 = scmp.ne.s32.totalorder %s131, %s132
      %p146 = scmp.eq.s32.totalorder %s25, 1
      %p147 = por %p145, %p146
      %p149 = scmp.ne.s32.totalorder %s132, %s148
      %p150 = scmp.eq.s32.totalorder %s25, 0
      %p151 = por %p149, %p150
      %s152 = ssub.s32 %s19, %s26
      %p153 = scmp.eq.s32.totalorder %s152, 0
      %s155 = sadd.s32 %s154, 1
      %s156 = scalar_select %p153, %s154, %s155
      %p159 = pneg %p153
      %p160 = scmp.eq.s32.totalorder %s19, 1
      %p161 = por %p159, %p160
      %p162 = scmp.ne.s32.totalorder %s154, %s157
      %p163 = scmp.eq.s32.totalorder %s19, 0
      %p164 = por %p162, %p163
      %p165 = scmp.ne.s32.totalorder %s154, %s157
      %p166 = scmp.eq.s32.totalorder %s24, 1
      %p167 = por %p165, %p166
      %p168 = scmp.ne.s32.totalorder %s157, %s158
      %p169 = scmp.eq.s32.totalorder %s24, 0
      %p170 = por %p168, %p169
      %p171 = scmp.ne.s32.totalorder %s157, %s158
      %p172 = scmp.eq.s32.totalorder %s25, 1
      %p173 = por %p171, %p172
      %p175 = scmp.ne.s32.totalorder %s158, %s174
      %p176 = scmp.eq.s32.totalorder %s25, 0
      %p177 = por %p175, %p176
      %s179 = sadd.s32 %s178, 1
      %p182 = scmp.eq.s32.totalorder %s19, 1
      %p183 = scmp.ne.s32.totalorder %s178, %s180
      %p184 = scmp.eq.s32.totalorder %s19, 0
      %p185 = por %p183, %p184
      %p186 = scmp.ne.s32.totalorder %s178, %s180
      %p187 = scmp.eq.s32.totalorder %s24, 1
      %p188 = por %p186, %p187
      %p189 = scmp.ne.s32.totalorder %s180, %s181
      %p190 = scmp.eq.s32.totalorder %s24, 0
      %p191 = por %p189, %p190
      %p192 = scmp.ne.s32.totalorder %s180, %s181
      %p193 = scmp.eq.s32.totalorder %s25, 1
      %p194 = por %p192, %p193
      %p196 = scmp.ne.s32.totalorder %s181, %s195
      %p197 = scmp.eq.s32.totalorder %s25, 0
      %p198 = por %p196, %p197
      %p199 = scmp.le.s32.totalorder 1, %s19
      %p200 = scmp.lt.s32.totalorder %s19, 3
      %p201 = pnand %p199, %p200
      %p202 = pneg %p201
      // Predicated region
      $region9: #{tpu_custom_call.1} parent=5 // pred_check
        _
      $region10: #{tpu_custom_call.1} parent=5 // pred_check_branch
        %204 = sbr.rel (%p201) target = $region12
      $region11: #{tpu_custom_call.1} parent=5 // pred_region
        %s205 = ssub.s32 %s19, 1
        // Predicated region
        $region13: #{tpu_custom_call.1} parent=11 // pred_check
          %p206 = pneg %p40
        $region14: #{tpu_custom_call.1} parent=11 // pred_check_branch
          %208 = sbr.rel (%p206) target = $region16
        $region15: #{tpu_custom_call.1} parent=11 // pred_region
          _
        $region16: #{tpu_custom_call.1} parent=11 // pred_fallthru
          _
      $region12: #{tpu_custom_call.1} parent=5 // pred_fallthru
        _
      %p209 = scmp.lt.s32.totalorder %s19, 2
      // Predicated region
      $region17: #{tpu_custom_call.1} parent=5 // pred_check
        %p210 = pneg %p209
      $region18: #{tpu_custom_call.1} parent=5 // pred_check_branch
        %212 = sbr.rel (%p210) target = $region20
      $region19: #{tpu_custom_call.1} parent=5 // pred_region
        // Predicated region
        $region21: #{tpu_custom_call.1} parent=19 // pred_check
          %p213 = pneg %p60
        $region22: #{tpu_custom_call.1} parent=19 // pred_check_branch
          %215 = sbr.rel (%p213) target = $region24
        $region23: #{tpu_custom_call.1} parent=19 // pred_region
          %s216 = sand.u32 %s50, 1
          %s217 = scalar_lea.sflag [#allocation5], %s216
          %s218 = sand.u32 %s50, 1
          %s219 = smul.addr %s218, 64
          %s220 = scalar_lea.vmem [#allocation4], %s219
          %s222 = ssub.s32 1024, 1024
          %223 = vsyncadd %s217, %s222
          %s224 = smul.addr %s19, 8
          %s225 = smul.addr %s224, 128
          %s226 = scalar_lea.hbm %s1, %s225
          %s227 = sshll.u32 %s220, 4
          %s228 = int_to_ptr.vmem [resolvable:$true] %s227
          %233 = dma.hbm_to_vmem [thread:$0]  %s226, 1024, %s228, %s217, 512, 512, 32
        $region24: #{tpu_custom_call.1} parent=19 // pred_fallthru
          _
        // Predicated region
        $region25: #{tpu_custom_call.1} parent=19 // pred_check
          %p234 = pneg %p86
        $region26: #{tpu_custom_call.1} parent=19 // pred_check_branch
          %236 = sbr.rel (%p234) target = $region28
        $region27: #{tpu_custom_call.1} parent=19 // pred_region
          %s237 = sand.u32 %s19, 1
          %s238 = scalar_lea.sflag [#allocation8], %s237
          %s239 = sand.u32 %s76, 1
          %s240 = smul.addr %s239, 512
          %s241 = scalar_lea.vmem [#allocation7], %s240
          %s243 = ssub.s32 8192, 8192
          %244 = vsyncadd %s238, %s243
          %s245 = smul.addr %s19, 64
          %s246 = smul.addr %s245, 128
          %s247 = scalar_lea.hbm %s2, %s246
          %s248 = sshll.u32 %s241, 4
          %s249 = int_to_ptr.vmem [resolvable:$true] %s248
          %254 = dma.hbm_to_vmem [thread:$0]  %s247, 8192, %s249, %s238, 512, 512, 32
        $region28: #{tpu_custom_call.1} parent=19 // pred_fallthru
          _
        // Predicated region
        $region29: #{tpu_custom_call.1} parent=19 // pred_check
          %p255 = pneg %p112
        $region30: #{tpu_custom_call.1} parent=19 // pred_check_branch
          %257 = sbr.rel (%p255) target = $region32
        $region31: #{tpu_custom_call.1} parent=19 // pred_region
          %p258 = scmp.lt.s32.totalorder %s19, 1
          %s259 = scalar_select %p258, %s19, 1
          %s260 = smul.addr %s259, 4
          %s261 = scalar_lea.vmem %s3, %s260
        $region32: #{tpu_custom_call.1} parent=19 // pred_fallthru
          _
        // Predicated region
        $region33: #{tpu_custom_call.1} parent=19 // pred_check
          %p262 = pneg %p138
        $region34: #{tpu_custom_call.1} parent=19 // pred_check_branch
          %264 = sbr.rel (%p262) target = $region36
        $region35: #{tpu_custom_call.1} parent=19 // pred_region
          %s265 = sand.u32 %s19, 1
          %s266 = scalar_lea.sflag [#allocation8], %s265
          %s267 = sand.u32 %s128, 1
          %s268 = smul.addr %s267, 128
          %s269 = scalar_lea.vmem [#allocation9], %s268
          %s271 = ssub.s32 2048, 2048
          %272 = vsyncadd %s266, %s271
          %s273 = smul.addr %s19, 16
          %s274 = smul.addr %s273, 128
          %s275 = scalar_lea.hbm %s4, %s274
          %s276 = sshll.u32 %s269, 4
          %s277 = int_to_ptr.vmem [resolvable:$true] %s276
          %282 = dma.hbm_to_vmem [thread:$0]  %s275, 2048, %s277, %s266, 128, 128, 8
        $region36: #{tpu_custom_call.1} parent=19 // pred_fallthru
          _
        // Predicated region
        $region37: #{tpu_custom_call.1} parent=19 // pred_check
          %p283 = pneg %p164
        $region38: #{tpu_custom_call.1} parent=19 // pred_check_branch
          %285 = sbr.rel (%p283) target = $region40
        $region39: #{tpu_custom_call.1} parent=19 // pred_region
          %p286 = scmp.lt.s32.totalorder %s19, 1
          %s287 = scalar_select %p286, %s19, 1
          %s288 = scalar_lea.vmem %s5, %s287
        $region40: #{tpu_custom_call.1} parent=19 // pred_fallthru
          _
      $region20: #{tpu_custom_call.1} parent=5 // pred_fallthru
        _
      %p289 = scmp.le.s32.totalorder 1, %s19
      %p290 = scmp.lt.s32.totalorder %s19, 3
      %p291 = pnand %p289, %p290
      %p292 = pneg %p291
      // Predicated region
      $region41: #{tpu_custom_call.1} parent=5 // pred_check
        _
      $region42: #{tpu_custom_call.1} parent=5 // pred_check_branch
        %294 = sbr.rel (%p291) target = $region44
      $region43: #{tpu_custom_call.1} parent=5 // pred_region
        %s295 = ssub.s32 %s19, 1
        %s296 = sand.u32 %s53, 1
        %s297 = scalar_lea.sflag [#allocation5], %s296
        %s298 = sand.u32 %s53, 1
        %s299 = smul.addr %s298, 64
        %s300 = scalar_lea.vmem [#allocation4], %s299
        // Predicated region
        $region45: #{tpu_custom_call.1} parent=43 // pred_check
          %p301 = pneg %p66
        $region46: #{tpu_custom_call.1} parent=43 // pred_check_branch
          %303 = sbr.rel (%p301) target = $region48
        $region47: #{tpu_custom_call.1} parent=43 // pred_region
          %304 = dma.done %s297, 1024
        $region48: #{tpu_custom_call.1} parent=43 // pred_fallthru
          _
        %s305 = sand.u32 %s24, 1
        %s306 = scalar_lea.sflag [#allocation8], %s305
        %s307 = sand.u32 %s79, 1
        %s308 = smul.addr %s307, 512
        %s309 = scalar_lea.vmem [#allocation7], %s308
        // Predicated region
        $region49: #{tpu_custom_call.1} parent=43 // pred_check
          %p310 = pneg %p92
        $region50: #{tpu_custom_call.1} parent=43 // pred_check_branch
          %312 = sbr.rel (%p310) target = $region52
        $region51: #{tpu_custom_call.1} parent=43 // pred_region
          %313 = dma.done %s306, 8192
        $region52: #{tpu_custom_call.1} parent=43 // pred_fallthru
          _
        %s314 = sand.u32 %s24, 1
        %s315 = scalar_lea.sflag [#allocation8], %s314
        %s316 = sand.u32 %s131, 1
        %s317 = smul.addr %s316, 128
        %s318 = scalar_lea.vmem [#allocation9], %s317
        // Predicated region
        $region53: #{tpu_custom_call.1} parent=43 // pred_check
          %p319 = pneg %p144
        $region54: #{tpu_custom_call.1} parent=43 // pred_check_branch
          %321 = sbr.rel (%p319) target = $region56
        $region55: #{tpu_custom_call.1} parent=43 // pred_region
          %322 = dma.done %s315, 2048
        $region56: #{tpu_custom_call.1} parent=43 // pred_fallthru
          _
        %p323 = pneg %p40
        %p324 = pneg %p37
        %s325 = sand.u32 %s53, 1
        %s326 = scalar_lea.sflag [#allocation5], %s325
        %s327 = sand.u32 %s53, 1
        %s328 = smul.addr %s327, 64
        %s329 = scalar_lea.vmem [#allocation4], %s328
        %p330 = pneg %p66
        %p331 = pneg %p63
        %s332 = sand.u32 %s24, 1
        %s333 = scalar_lea.sflag [#allocation8], %s332
        %s334 = sand.u32 %s79, 1
        %s335 = smul.addr %s334, 512
        %s336 = scalar_lea.vmem [#allocation7], %s335
        %p337 = pneg %p92
        %p338 = pneg %p89
        %p339 = scmp.lt.s32.totalorder %s24, 1
        %s340 = scalar_select %p339, %s24, 1
        %s341 = smul.addr %s340, 4
        %s342 = scalar_lea.vmem %s3, %s341
        %p343 = pneg %p118
        %p344 = pneg %p115
        %s345 = sand.u32 %s24, 1
        %s346 = scalar_lea.sflag [#allocation8], %s345
        %s347 = sand.u32 %s131, 1
        %s348 = smul.addr %s347, 128
        %s349 = scalar_lea.vmem [#allocation9], %s348
        %p350 = pneg %p144
        %p351 = pneg %p141
        %p352 = scmp.lt.s32.totalorder %s24, 1
        %s353 = scalar_select %p352, %s24, 1
        %s354 = scalar_lea.vmem %s5, %s353
        %p355 = pneg %p170
        %p356 = pneg %p167
        %p357 = pneg %p191
        %p358 = pneg %p188
        %p359 = scmp.lt.s32.totalorder %s24, 1
        %s360 = scalar_select %p359, %s24, 1
        %s361 = smul.addr %s360, 4
        %s362 = scalar_lea.vmem %s3, %s361
        %p363 = scmp.lt.s32.totalorder %s24, 1
        %s364 = scalar_select %p363, %s24, 1
        %s365 = scalar_lea.vmem %s5, %s364
        %v366 = vld [vmem:[%s0] sm:$0xff]
        %v367 = vld [vmem:[%s0 + $0x8] sm:$0xff]
        %v368 = vld [vmem:[%s0 + $0x10] sm:$0xff]
        %v369 = vld [vmem:[%s0 + $0x18] sm:$0xff]
        %v370 = vld [vmem:[%s0 + $0x20] sm:$0xff]
        %v371 = vld [vmem:[%s0 + $0x28] sm:$0xff]
        %v372 = vld [vmem:[%s0 + $0x30] sm:$0xff]
        %v373 = vld [vmem:[%s0 + $0x38] sm:$0xff]
        %v374 = vld [vmem:[%s300] sm:$0xff]
        %v375 = vld [vmem:[%s300 + $0x8] sm:$0xff]
        %v376 = vld [vmem:[%s300 + $0x10] sm:$0xff]
        %v377 = vld [vmem:[%s300 + $0x18] sm:$0xff]
        %v378 = vld [vmem:[%s300 + $0x20] sm:$0xff]
        %v379 = vld [vmem:[%s300 + $0x28] sm:$0xff]
        %v380 = vld [vmem:[%s300 + $0x30] sm:$0xff]
        %v381 = vld [vmem:[%s300 + $0x38] sm:$0xff]
        %v382 = vld [vmem:[%s362] sm:$0xf]
        %v384 = vlaneseq
        %v385 = vshrl.u32 %v384, 7
        %v386 = vsub.s32 0, %v385
        %v387 = vrot.slane %v382, %v386
        %v388 = vlaneseq
        %v389 = vshrl.u32 %v388, 7
        %v390 = vsub.s32 1, %v389
        %v391 = vrot.slane %v382, %v390
        %v392 = vlaneseq
        %v393 = vshrl.u32 %v392, 7
        %v394 = vsub.s32 2, %v393
        %v395 = vrot.slane %v382, %v394
        %v396 = vlaneseq
        %v397 = vshrl.u32 %v396, 7
        %v398 = vsub.s32 3, %v397
        %v399 = vrot.slane %v382, %v398
        %vm404 = vcmask 130048
        %v406 = vsel %vm404, %v366, 0
        %v409 = vsel %vm404, %v367, 0
        %v412 = vsel %vm404, %v368, 0
        %v415 = vsel %vm404, %v369, 0
        %v418 = vsel %vm404, %v370, 0
        %v421 = vsel %vm404, %v371, 0
        %v424 = vsel %vm404, %v372, 0
        %v427 = vsel %vm404, %v373, 0
        %429 = vmatprep.subr.mxu0 0.0
        %430 = vmatpush1.msra.mxu0 0.0
        %431 = vmatprep.subr.mxu0 0.0
        %432 = vmatpush1.msra.mxu0 0.0
        %433 = vmatprep.subr.mxu0 0.0
        %434 = vmatpush1.msra.mxu0 0.0
        %435 = vmatprep.subr.mxu0 0.0
        %436 = vmatpush1.msra.mxu0 0.0
        %437 = vmatprep.subr.mxu0 0.0
        %438 = vmatpush1.msra.mxu0 0.0
        %439 = vmatprep.subr.mxu0 0.0
        %440 = vmatpush1.msra.mxu0 0.0
        %441 = vmatprep.subr.mxu0 0.0
        %442 = vmatpush1.msra.mxu0 0.0
        %443 = vmatprep.subr.mxu0 0.0
        %444 = vmatpush1.msra.mxu0 0.0
        %445 = vmatprep.subr.mxu0 0.0
        %446 = vmatpush1.msra.mxu0 0.0
        %447 = vmatprep.subr.mxu0 0.0
        %448 = vmatpush1.msra.mxu0 0.0
        %449 = vmatprep.subr.mxu0 0.0
        %450 = vmatpush1.msra.mxu0 0.0
        %451 = vmatprep.subr.mxu0 0.0
        %452 = vmatpush1.msra.mxu0 0.0
        %453 = vmatprep.subr.mxu0 0.0
        %454 = vmatpush1.msra.mxu0 0.0
        %455 = vmatprep.subr.mxu0 0.0
        %456 = vmatpush1.msra.mxu0 0.0
        %457 = vmatprep.subr.mxu0 %v379
        %458 = vmatpush1.msra.mxu0 %v378
        %459 = vmatprep.subr.mxu0 %v375
        %460 = vmatpush1.msra.mxu0 %v374
        %461 = vmatprep.subr.mxu0 0.0
        %462 = vmatpush2.msra.mxu0 0.0
        %463 = vmatprep.subr.mxu0 0.0
        %464 = vmatpush2.msra.mxu0 0.0
        %465 = vmatprep.subr.mxu0 0.0
        %466 = vmatpush2.msra.mxu0 0.0
        %467 = vmatprep.subr.mxu0 0.0
        %468 = vmatpush2.msra.mxu0 0.0
        %469 = vmatprep.subr.mxu0 0.0
        %470 = vmatpush2.msra.mxu0 0.0
        %471 = vmatprep.subr.mxu0 0.0
        %472 = vmatpush2.msra.mxu0 0.0
        %473 = vmatprep.subr.mxu0 0.0
        %474 = vmatpush2.msra.mxu0 0.0
        %475 = vmatprep.subr.mxu0 0.0
        %476 = vmatpush2.msra.mxu0 0.0
        %477 = vmatprep.subr.mxu0 0.0
        %478 = vmatpush2.msra.mxu0 0.0
        %479 = vmatprep.subr.mxu0 0.0
        %480 = vmatpush2.msra.mxu0 0.0
        %481 = vmatprep.subr.mxu0 0.0
        %482 = vmatpush2.msra.mxu0 0.0
        %483 = vmatprep.subr.mxu0 0.0
        %484 = vmatpush2.msra.mxu0 0.0
        %485 = vmatprep.subr.mxu0 0.0
        %486 = vmatpush2.msra.mxu0 0.0
        %487 = vmatprep.subr.mxu0 0.0
        %488 = vmatpush2.msra.mxu0 0.0
        %489 = vmatprep.subr.mxu0 0.0
        %490 = vmatpush2.msra.mxu0 0.0
        %491 = vmatprep.subr.mxu0 0.0
        %492 = vmatpush2.msra.mxu0 0.0
        %493 = vmatprep.mubr.f32.mxu0 0.0
        %494 = vmatmul.mubr.f32.gmra.mxu0 %v406
        %v495 = vpop.f32.mrf.mxu0
        %v496 = vadd.f32 %v387, %v495
        %v497 = vpop.f32.mrf.mxu0
        %v498 = vadd.f32 %v391, %v497
        %499 = vmatprep.mubr.f32.mxu0 0.0
        %500 = vmatmul.mubr.f32.gmra.mxu0 %v409
        %v501 = vpop.f32.mrf.mxu0
        %v502 = vadd.f32 %v387, %v501
        %v503 = vpop.f32.mrf.mxu0
        %v504 = vadd.f32 %v391, %v503
        %505 = vmatprep.mubr.f32.mxu0 0.0
        %506 = vmatmul.mubr.f32.gmra.mxu0 %v412
        %v507 = vpop.f32.mrf.mxu0
        %v508 = vadd.f32 %v387, %v507
        %v509 = vpop.f32.mrf.mxu0
        %v510 = vadd.f32 %v391, %v509
        %511 = vmatprep.mubr.f32.mxu0 0.0
        %512 = vmatmul.mubr.f32.gmra.mxu0 %v415
        %v513 = vpop.f32.mrf.mxu0
        %v514 = vadd.f32 %v387, %v513
        %v515 = vpop.f32.mrf.mxu0
        %v516 = vadd.f32 %v391, %v515
        %517 = vmatprep.mubr.f32.mxu0 0.0
        %518 = vmatmul.mubr.f32.gmra.mxu0 %v418
        %v519 = vpop.f32.mrf.mxu0
        %v520 = vadd.f32 %v387, %v519
        %v521 = vpop.f32.mrf.mxu0
        %v522 = vadd.f32 %v391, %v521
        %523 = vmatprep.mubr.f32.mxu0 0.0
        %524 = vmatmul.mubr.f32.gmra.mxu0 %v421
        %v525 = vpop.f32.mrf.mxu0
        %v526 = vadd.f32 %v387, %v525
        %v527 = vpop.f32.mrf.mxu0
        %v528 = vadd.f32 %v391, %v527
        %529 = vmatprep.mubr.f32.mxu0 0.0
        %530 = vmatmul.mubr.f32.gmra.mxu0 %v424
        %v531 = vpop.f32.mrf.mxu0
        %v532 = vadd.f32 %v387, %v531
        %v533 = vpop.f32.mrf.mxu0
        %v534 = vadd.f32 %v391, %v533
        %535 = vmatprep.mubr.f32.mxu0 0.0
        %536 = vmatmul.mubr.f32.gmra.mxu0 %v427
        %v537 = vpop.f32.mrf.mxu0
        %v538 = vadd.f32 %v387, %v537
        %v539 = vpop.f32.mrf.mxu0
        %v540 = vadd.f32 %v391, %v539
        %541 = vdwg.mxu0
        %542 = vmatprep.subr.mxu0 0.0
        %543 = vmatpush1.msra.mxu0 0.0
        %544 = vmatprep.subr.mxu0 0.0
        %545 = vmatpush1.msra.mxu0 0.0
        %546 = vmatprep.subr.mxu0 0.0
        %547 = vmatpush1.msra.mxu0 0.0
        %548 = vmatprep.subr.mxu0 0.0
        %549 = vmatpush1.msra.mxu0 0.0
        %550 = vmatprep.subr.mxu0 0.0
        %551 = vmatpush1.msra.mxu0 0.0
        %552 = vmatprep.subr.mxu0 0.0
        %553 = vmatpush1.msra.mxu0 0.0
        %554 = vmatprep.subr.mxu0 0.0
        %555 = vmatpush1.msra.mxu0 0.0
        %556 = vmatprep.subr.mxu0 0.0
        %557 = vmatpush1.msra.mxu0 0.0
        %558 = vmatprep.subr.mxu0 0.0
        %559 = vmatpush1.msra.mxu0 0.0
        %560 = vmatprep.subr.mxu0 0.0
        %561 = vmatpush1.msra.mxu0 0.0
        %562 = vmatprep.subr.mxu0 0.0
        %563 = vmatpush1.msra.mxu0 0.0
        %564 = vmatprep.subr.mxu0 0.0
        %565 = vmatpush1.msra.mxu0 0.0
        %566 = vmatprep.subr.mxu0 0.0
        %567 = vmatpush1.msra.mxu0 0.0
        %568 = vmatprep.subr.mxu0 0.0
        %569 = vmatpush1.msra.mxu0 0.0
        %570 = vmatprep.subr.mxu0 %v381
        %571 = vmatpush1.msra.mxu0 %v380
        %572 = vmatprep.subr.mxu0 %v377
        %573 = vmatpush1.msra.mxu0 %v376
        %574 = vmatprep.subr.mxu0 0.0
        %575 = vmatpush2.msra.mxu0 0.0
        %576 = vmatprep.subr.mxu0 0.0
        %577 = vmatpush2.msra.mxu0 0.0
        %578 = vmatprep.subr.mxu0 0.0
        %579 = vmatpush2.msra.mxu0 0.0
        %580 = vmatprep.subr.mxu0 0.0
        %581 = vmatpush2.msra.mxu0 0.0
        %582 = vmatprep.subr.mxu0 0.0
        %583 = vmatpush2.msra.mxu0 0.0
        %584 = vmatprep.subr.mxu0 0.0
        %585 = vmatpush2.msra.mxu0 0.0
        %586 = vmatprep.subr.mxu0 0.0
        %587 = vmatpush2.msra.mxu0 0.0
        %588 = vmatprep.subr.mxu0 0.0
        %589 = vmatpush2.msra.mxu0 0.0
        %590 = vmatprep.subr.mxu0 0.0
        %591 = vmatpush2.msra.mxu0 0.0
        %592 = vmatprep.subr.mxu0 0.0
        %593 = vmatpush2.msra.mxu0 0.0
        %594 = vmatprep.subr.mxu0 0.0
        %595 = vmatpush2.msra.mxu0 0.0
        %596 = vmatprep.subr.mxu0 0.0
        %597 = vmatpush2.msra.mxu0 0.0
        %598 = vmatprep.subr.mxu0 0.0
        %599 = vmatpush2.msra.mxu0 0.0
        %600 = vmatprep.subr.mxu0 0.0
        %601 = vmatpush2.msra.mxu0 0.0
        %602 = vmatprep.subr.mxu0 0.0
        %603 = vmatpush2.msra.mxu0 0.0
        %604 = vmatprep.subr.mxu0 0.0
        %605 = vmatpush2.msra.mxu0 0.0
        %606 = vmatprep.mubr.f32.mxu0 0.0
        %607 = vmatmul.mubr.f32.gmra.mxu0 %v406
        %v608 = vpop.f32.mrf.mxu0
        %v609 = vadd.f32 %v395, %v608
        %v610 = vpop.f32.mrf.mxu0
        %v611 = vadd.f32 %v399, %v610
        %612 = vmatprep.mubr.f32.mxu0 0.0
        %613 = vmatmul.mubr.f32.gmra.mxu0 %v409
        %v614 = vpop.f32.mrf.mxu0
        %v615 = vadd.f32 %v395, %v614
        %v616 = vpop.f32.mrf.mxu0
        %v617 = vadd.f32 %v399, %v616
        %618 = vmatprep.mubr.f32.mxu0 0.0
        %619 = vmatmul.mubr.f32.gmra.mxu0 %v412
        %v620 = vpop.f32.mrf.mxu0
        %v621 = vadd.f32 %v395, %v620
        %v622 = vpop.f32.mrf.mxu0
        %v623 = vadd.f32 %v399, %v622
        %624 = vmatprep.mubr.f32.mxu0 0.0
        %625 = vmatmul.mubr.f32.gmra.mxu0 %v415
        %v626 = vpop.f32.mrf.mxu0
        %v627 = vadd.f32 %v395, %v626
        %v628 = vpop.f32.mrf.mxu0
        %v629 = vadd.f32 %v399, %v628
        %630 = vmatprep.mubr.f32.mxu0 0.0
        %631 = vmatmul.mubr.f32.gmra.mxu0 %v418
        %v632 = vpop.f32.mrf.mxu0
        %v633 = vadd.f32 %v395, %v632
        %v634 = vpop.f32.mrf.mxu0
        %v635 = vadd.f32 %v399, %v634
        %636 = vmatprep.mubr.f32.mxu0 0.0
        %637 = vmatmul.mubr.f32.gmra.mxu0 %v421
        %v638 = vpop.f32.mrf.mxu0
        %v639 = vadd.f32 %v395, %v638
        %v640 = vpop.f32.mrf.mxu0
        %v641 = vadd.f32 %v399, %v640
        %642 = vmatprep.mubr.f32.mxu0 0.0
        %643 = vmatmul.mubr.f32.gmra.mxu0 %v424
        %v644 = vpop.f32.mrf.mxu0
        %v645 = vadd.f32 %v395, %v644
        %v646 = vpop.f32.mrf.mxu0
        %v647 = vadd.f32 %v399, %v646
        %648 = vmatprep.mubr.f32.mxu0 0.0
        %649 = vmatmul.mubr.f32.gmra.mxu0 %v427
        %v650 = vpop.f32.mrf.mxu0
        %v651 = vadd.f32 %v395, %v650
        %v652 = vpop.f32.mrf.mxu0
        %v653 = vadd.f32 %v399, %v652
        %654 = vdwg.mxu0
        %655 = vst [vmem:[#allocation2] sm:$0xff] %v496
        %656 = vst [vmem:[#allocation2 + $0x8] sm:$0xff] %v498
        %657 = vst [vmem:[#allocation2 + $0x10] sm:$0xff] %v609
        %658 = vst [vmem:[#allocation2 + $0x18] sm:$0xff] %v611
        %659 = vst [vmem:[#allocation2 + $0x20] sm:$0xff] %v502
        %660 = vst [vmem:[#allocation2 + $0x28] sm:$0xff] %v504
        %661 = vst [vmem:[#allocation2 + $0x30] sm:$0xff] %v615
        %662 = vst [vmem:[#allocation2 + $0x38] sm:$0xff] %v617
        %663 = vst [vmem:[#allocation2 + $0x40] sm:$0xff] %v508
        %664 = vst [vmem:[#allocation2 + $0x48] sm:$0xff] %v510
        %665 = vst [vmem:[#allocation2 + $0x50] sm:$0xff] %v621
        %666 = vst [vmem:[#allocation2 + $0x58] sm:$0xff] %v623
        %667 = vst [vmem:[#allocation2 + $0x60] sm:$0xff] %v514
        %668 = vst [vmem:[#allocation2 + $0x68] sm:$0xff] %v516
        %669 = vst [vmem:[#allocation2 + $0x70] sm:$0xff] %v627
        %670 = vst [vmem:[#allocation2 + $0x78] sm:$0xff] %v629
        %671 = vst [vmem:[#allocation2 + $0x80] sm:$0xff] %v520
        %672 = vst [vmem:[#allocation2 + $0x88] sm:$0xff] %v522
        %673 = vst [vmem:[#allocation2 + $0x90] sm:$0xff] %v633
        %674 = vst [vmem:[#allocation2 + $0x98] sm:$0xff] %v635
        %675 = vst [vmem:[#allocation2 + $0xa0] sm:$0xff] %v526
        %676 = vst [vmem:[#allocation2 + $0xa8] sm:$0xff] %v528
        %677 = vst [vmem:[#allocation2 + $0xb0] sm:$0xff] %v639
        %678 = vst [vmem:[#allocation2 + $0xb8] sm:$0xff] %v641
        %679 = vst [vmem:[#allocation2 + $0xc0] sm:$0xff] %v532
        %680 = vst [vmem:[#allocation2 + $0xc8] sm:$0xff] %v534
        %681 = vst [vmem:[#allocation2 + $0xd0] sm:$0xff] %v645
        %682 = vst [vmem:[#allocation2 + $0xd8] sm:$0xff] %v647
        %683 = vst [vmem:[#allocation2 + $0xe0] sm:$0xff] %v538
        %684 = vst [vmem:[#allocation2 + $0xe8] sm:$0xff] %v540
        %685 = vst [vmem:[#allocation2 + $0xf0] sm:$0xff] %v651
        %686 = vst [vmem:[#allocation2 + $0xf8] sm:$0xff] %v653
        %v687 = vld [vmem:[%s309] sm:$0xff]
        %v688 = vld [vmem:[%s309 + $0x8] sm:$0xff]
        %v689 = vld [vmem:[%s309 + $0x10] sm:$0xff]
        %v690 = vld [vmem:[%s309 + $0x18] sm:$0xff]
        %v691 = vld [vmem:[%s309 + $0x20] sm:$0xff]
        %v692 = vld [vmem:[%s309 + $0x28] sm:$0xff]
        %v693 = vld [vmem:[%s309 + $0x30] sm:$0xff]
        %v694 = vld [vmem:[%s309 + $0x38] sm:$0xff]
        %v695 = vld [vmem:[%s309 + $0x40] sm:$0xff]
        %v696 = vld [vmem:[%s309 + $0x48] sm:$0xff]
        %v697 = vld [vmem:[%s309 + $0x50] sm:$0xff]
        %v698 = vld [vmem:[%s309 + $0x58] sm:$0xff]
        %v699 = vld [vmem:[%s309 + $0x60] sm:$0xff]
        %v700 = vld [vmem:[%s309 + $0x68] sm:$0xff]
        %v701 = vld [vmem:[%s309 + $0x70] sm:$0xff]
        %v702 = vld [vmem:[%s309 + $0x78] sm:$0xff]
        %v703 = vld [vmem:[%s309 + $0x80] sm:$0xff]
        %v704 = vld [vmem:[%s309 + $0x88] sm:$0xff]
        %v705 = vld [vmem:[%s309 + $0x90] sm:$0xff]
        %v706 = vld [vmem:[%s309 + $0x98] sm:$0xff]
        %v707 = vld [vmem:[%s309 + $0xa0] sm:$0xff]
        %v708 = vld [vmem:[%s309 + $0xa8] sm:$0xff]
        %v709 = vld [vmem:[%s309 + $0xb0] sm:$0xff]
        %v710 = vld [vmem:[%s309 + $0xb8] sm:$0xff]
        %v711 = vld [vmem:[%s309 + $0xc0] sm:$0xff]
        %v712 = vld [vmem:[%s309 + $0xc8] sm:$0xff]
        %v713 = vld [vmem:[%s309 + $0xd0] sm:$0xff]
        %v714 = vld [vmem:[%s309 + $0xd8] sm:$0xff]
        %v715 = vld [vmem:[%s309 + $0xe0] sm:$0xff]
        %v716 = vld [vmem:[%s309 + $0xe8] sm:$0xff]
        %v717 = vld [vmem:[%s309 + $0xf0] sm:$0xff]
        %v718 = vld [vmem:[%s309 + $0xf8] sm:$0xff]
        %v719 = vld [vmem:[%s309 + $0x100] sm:$0xff]
        %v720 = vld [vmem:[%s309 + $0x108] sm:$0xff]
        %v721 = vld [vmem:[%s309 + $0x110] sm:$0xff]
        %v722 = vld [vmem:[%s309 + $0x118] sm:$0xff]
        %v723 = vld [vmem:[%s309 + $0x120] sm:$0xff]
        %v724 = vld [vmem:[%s309 + $0x128] sm:$0xff]
        %v725 = vld [vmem:[%s309 + $0x130] sm:$0xff]
        %v726 = vld [vmem:[%s309 + $0x138] sm:$0xff]
        %v727 = vld [vmem:[%s309 + $0x140] sm:$0xff]
        %v728 = vld [vmem:[%s309 + $0x148] sm:$0xff]
        %v729 = vld [vmem:[%s309 + $0x150] sm:$0xff]
        %v730 = vld [vmem:[%s309 + $0x158] sm:$0xff]
        %v731 = vld [vmem:[%s309 + $0x160] sm:$0xff]
        %v732 = vld [vmem:[%s309 + $0x168] sm:$0xff]
        %v733 = vld [vmem:[%s309 + $0x170] sm:$0xff]
        %v734 = vld [vmem:[%s309 + $0x178] sm:$0xff]
        %v735 = vld [vmem:[%s309 + $0x180] sm:$0xff]
        %v736 = vld [vmem:[%s309 + $0x188] sm:$0xff]
        %v737 = vld [vmem:[%s309 + $0x190] sm:$0xff]
        %v738 = vld [vmem:[%s309 + $0x198] sm:$0xff]
        %v739 = vld [vmem:[%s309 + $0x1a0] sm:$0xff]
        %v740 = vld [vmem:[%s309 + $0x1a8] sm:$0xff]
        %v741 = vld [vmem:[%s309 + $0x1b0] sm:$0xff]
        %v742 = vld [vmem:[%s309 + $0x1b8] sm:$0xff]
        %v743 = vld [vmem:[%s309 + $0x1c0] sm:$0xff]
        %v744 = vld [vmem:[%s309 + $0x1c8] sm:$0xff]
        %v745 = vld [vmem:[%s309 + $0x1d0] sm:$0xff]
        %v746 = vld [vmem:[%s309 + $0x1d8] sm:$0xff]
        %v747 = vld [vmem:[%s309 + $0x1e0] sm:$0xff]
        %v748 = vld [vmem:[%s309 + $0x1e8] sm:$0xff]
        %v749 = vld [vmem:[%s309 + $0x1f0] sm:$0xff]
        %v750 = vld [vmem:[%s309 + $0x1f8] sm:$0xff]
        %s751 = smul.u32 %s24, 56
        %s752 = sshra.s32 %s751, 3
        %s753 = sand.u32 %s751, 7
        %s754 = smul.u32 %s752, 4
        %s755 = smul.addr %s754, 8
        %s756 = scalar_lea.vmem [#allocation2], %s755
        %v757 = vld [vmem:[%s756] sm:$0xff]
        %v758 = vld [vmem:[%s756 + $0x8] sm:$0xff]
        %v759 = vld [vmem:[%s756 + $0x10] sm:$0xff]
        %v760 = vld [vmem:[%s756 + $0x18] sm:$0xff]
        %761 = vmatprep.subr.mxu0 %v748
        %762 = vmatpush1.msra.mxu0 %v747
        %763 = vmatprep.subr.mxu0 %v744
        %764 = vmatpush1.msra.mxu0 %v743
        %765 = vmatprep.subr.mxu0 %v740
        %766 = vmatpush1.msra.mxu0 %v739
        %767 = vmatprep.subr.mxu0 %v736
        %768 = vmatpush1.msra.mxu0 %v735
        %769 = vmatprep.subr.mxu0 %v732
        %770 = vmatpush1.msra.mxu0 %v731
        %771 = vmatprep.subr.mxu0 %v728
        %772 = vmatpush1.msra.mxu0 %v727
        %773 = vmatprep.subr.mxu0 %v724
        %774 = vmatpush1.msra.mxu0 %v723
        %775 = vmatprep.subr.mxu0 %v720
        %776 = vmatpush1.msra.mxu0 %v719
        %777 = vmatprep.subr.mxu0 %v716
        %778 = vmatpush1.msra.mxu0 %v715
        %779 = vmatprep.subr.mxu0 %v712
        %780 = vmatpush1.msra.mxu0 %v711
        %781 = vmatprep.subr.mxu0 %v708
        %782 = vmatpush1.msra.mxu0 %v707
        %783 = vmatprep.subr.mxu0 %v704
        %784 = vmatpush1.msra.mxu0 %v703
        %785 = vmatprep.subr.mxu0 %v700
        %786 = vmatpush1.msra.mxu0 %v699
        %787 = vmatprep.subr.mxu0 %v696
        %788 = vmatpush1.msra.mxu0 %v695
        %789 = vmatprep.subr.mxu0 %v692
        %790 = vmatpush1.msra.mxu0 %v691
        %791 = vmatprep.subr.mxu0 %v688
        %792 = vmatpush1.msra.mxu0 %v687
        %793 = vmatprep.subr.mxu0 0.0
        %794 = vmatpush2.msra.mxu0 0.0
        %795 = vmatprep.subr.mxu0 0.0
        %796 = vmatpush2.msra.mxu0 0.0
        %797 = vmatprep.subr.mxu0 0.0
        %798 = vmatpush2.msra.mxu0 0.0
        %799 = vmatprep.subr.mxu0 0.0
        %800 = vmatpush2.msra.mxu0 0.0
        %801 = vmatprep.subr.mxu0 0.0
        %802 = vmatpush2.msra.mxu0 0.0
        %803 = vmatprep.subr.mxu0 0.0
        %804 = vmatpush2.msra.mxu0 0.0
        %805 = vmatprep.subr.mxu0 0.0
        %806 = vmatpush2.msra.mxu0 0.0
        %807 = vmatprep.subr.mxu0 0.0
        %808 = vmatpush2.msra.mxu0 0.0
        %809 = vmatprep.subr.mxu0 0.0
        %810 = vmatpush2.msra.mxu0 0.0
        %811 = vmatprep.subr.mxu0 0.0
        %812 = vmatpush2.msra.mxu0 0.0
        %813 = vmatprep.subr.mxu0 0.0
        %814 = vmatpush2.msra.mxu0 0.0
        %815 = vmatprep.subr.mxu0 0.0
        %816 = vmatpush2.msra.mxu0 0.0
        %817 = vmatprep.subr.mxu0 0.0
        %818 = vmatpush2.msra.mxu0 0.0
        %819 = vmatprep.subr.mxu0 0.0
        %820 = vmatpush2.msra.mxu0 0.0
        %821 = vmatprep.subr.mxu0 0.0
        %822 = vmatpush2.msra.mxu0 0.0
        %823 = vmatprep.subr.mxu0 0.0
        %824 = vmatpush2.msra.mxu0 0.0
        %825 = vmatprep.mubr.f32.mxu0 0.0
        %826 = vmatmul.mubr.f32.gmra.mxu0 0.0
        %v827 = vpop.f32.mrf.mxu0
        %v828 = vadd.f32 0.0, %v827
        %v829 = vpop.f32.mrf.mxu0
        %v830 = vadd.f32 0.0, %v829
        %831 = vdwg.mxu0
        %832 = vmatprep.subr.mxu0 %v750
        %833 = vmatpush1.msra.mxu0 %v749
        %834 = vmatprep.subr.mxu0 %v746
        %835 = vmatpush1.msra.mxu0 %v745
        %836 = vmatprep.subr.mxu0 %v742
        %837 = vmatpush1.msra.mxu0 %v741
        %838 = vmatprep.subr.mxu0 %v738
        %839 = vmatpush1.msra.mxu0 %v737
        %840 = vmatprep.subr.mxu0 %v734
        %841 = vmatpush1.msra.mxu0 %v733
        %842 = vmatprep.subr.mxu0 %v730
        %843 = vmatpush1.msra.mxu0 %v729
        %844 = vmatprep.subr.mxu0 %v726
        %845 = vmatpush1.msra.mxu0 %v725
        %846 = vmatprep.subr.mxu0 %v722
        %847 = vmatpush1.msra.mxu0 %v721
        %848 = vmatprep.subr.mxu0 %v718
        %849 = vmatpush1.msra.mxu0 %v717
        %850 = vmatprep.subr.mxu0 %v714
        %851 = vmatpush1.msra.mxu0 %v713
        %852 = vmatprep.subr.mxu0 %v710
        %853 = vmatpush1.msra.mxu0 %v709
        %854 = vmatprep.subr.mxu0 %v706
        %855 = vmatpush1.msra.mxu0 %v705
        %856 = vmatprep.subr.mxu0 %v702
        %857 = vmatpush1.msra.mxu0 %v701
        %858 = vmatprep.subr.mxu0 %v698
        %859 = vmatpush1.msra.mxu0 %v697
        %860 = vmatprep.subr.mxu0 %v694
        %861 = vmatpush1.msra.mxu0 %v693
        %862 = vmatprep.subr.mxu0 %v690
        %863 = vmatpush1.msra.mxu0 %v689
        %864 = vmatprep.subr.mxu0 0.0
        %865 = vmatpush2.msra.mxu0 0.0
        %866 = vmatprep.subr.mxu0 0.0
        %867 = vmatpush2.msra.mxu0 0.0
        %868 = vmatprep.subr.mxu0 0.0
        %869 = vmatpush2.msra.mxu0 0.0
        %870 = vmatprep.subr.mxu0 0.0
        %871 = vmatpush2.msra.mxu0 0.0
        %872 = vmatprep.subr.mxu0 0.0
        %873 = vmatpush2.msra.mxu0 0.0
        %874 = vmatprep.subr.mxu0 0.0
        %875 = vmatpush2.msra.mxu0 0.0
        %876 = vmatprep.subr.mxu0 0.0
        %877 = vmatpush2.msra.mxu0 0.0
        %878 = vmatprep.subr.mxu0 0.0
        %879 = vmatpush2.msra.mxu0 0.0
        %880 = vmatprep.subr.mxu0 0.0
        %881 = vmatpush2.msra.mxu0 0.0
        %882 = vmatprep.subr.mxu0 0.0
        %883 = vmatpush2.msra.mxu0 0.0
        %884 = vmatprep.subr.mxu0 0.0
        %885 = vmatpush2.msra.mxu0 0.0
        %886 = vmatprep.subr.mxu0 0.0
        %887 = vmatpush2.msra.mxu0 0.0
        %888 = vmatprep.subr.mxu0 0.0
        %889 = vmatpush2.msra.mxu0 0.0
        %890 = vmatprep.subr.mxu0 0.0
        %891 = vmatpush2.msra.mxu0 0.0
        %892 = vmatprep.subr.mxu0 0.0
        %893 = vmatpush2.msra.mxu0 0.0
        %894 = vmatprep.subr.mxu0 0.0
        %895 = vmatpush2.msra.mxu0 0.0
        %896 = vmatprep.mubr.f32.mxu0 0.0
        %897 = vmatmul.mubr.f32.gmra.mxu0 0.0
        %v898 = vpop.f32.mrf.mxu0
        %v899 = vadd.f32 0.0, %v898
        %v900 = vpop.f32.mrf.mxu0
        %v901 = vadd.f32 0.0, %v900
        %902 = vdwg.mxu0
        %v903 = vadd.f32 %v757, %v828
        %v904 = vadd.f32 %v758, %v830
        %v905 = vadd.f32 %v759, %v899
        %v906 = vadd.f32 %v760, %v901
        %v907 = vxor.u32 %v903, 2147483648
        %v908 = vmul.f32 %v907, 1.442695
        %v909 = vpow.pop %v908
        %v910 = vadd.f32 %v909, 1.0
        %v911 = vrcp.pop %v910
        %v912 = vmul.f32 1.0, %v911
        %v913 = vxor.u32 %v904, 2147483648
        %v914 = vmul.f32 %v913, 1.442695
        %v915 = vpow.pop %v914
        %v916 = vadd.f32 %v915, 1.0
        %v917 = vrcp.pop %v916
        %v918 = vmul.f32 1.0, %v917
        %v919 = vtanh.pop %v905
        %v920 = vxor.u32 %v906, 2147483648
        %v921 = vmul.f32 %v920, 1.442695
        %v922 = vpow.pop %v921
        %v923 = vadd.f32 %v922, 1.0
        %v924 = vrcp.pop %v923
        %v925 = vmul.f32 1.0, %v924
        %v926 = vmul.f32 %v918, 0.0
        %v927 = vmul.f32 %v912, %v919
        %v928 = vadd.f32 %v926, %v927
        %v929 = vtanh.pop %v928
        %v930 = vmul.f32 %v925, %v929
        %s931 = scalar_lea.vmem [#allocation3], %s751
        %932 = vst [vmem:[%s931] sm:$0xff] %v930
        %s933 = smul.u32 %s24, 5
        %s934 = sadd.s32 %s933, 1
        %s935 = smul.u32 %s934, 8
        %s936 = sshra.s32 %s935, 3
        %s937 = sand.u32 %s935, 7
        %s938 = smul.u32 %s936, 4
        %s939 = smul.addr %s938, 8
        %s940 = scalar_lea.vmem [#allocation2], %s939
        %v941 = vld [vmem:[%s940] sm:$0xff]
        %v942 = vld [vmem:[%s940 + $0x8] sm:$0xff]
        %v943 = vld [vmem:[%s940 + $0x10] sm:$0xff]
        %v944 = vld [vmem:[%s940 + $0x18] sm:$0xff]
        %945 = vmatprep.subr.mxu0 %v748
        %946 = vmatpush1.msra.mxu0 %v747
        %947 = vmatprep.subr.mxu0 %v744
        %948 = vmatpush1.msra.mxu0 %v743
        %949 = vmatprep.subr.mxu0 %v740
        %950 = vmatpush1.msra.mxu0 %v739
        %951 = vmatprep.subr.mxu0 %v736
        %952 = vmatpush1.msra.mxu0 %v735
        %953 = vmatprep.subr.mxu0 %v732
        %954 = vmatpush1.msra.mxu0 %v731
        %955 = vmatprep.subr.mxu0 %v728
        %956 = vmatpush1.msra.mxu0 %v727
        %957 = vmatprep.subr.mxu0 %v724
        %958 = vmatpush1.msra.mxu0 %v723
        %959 = vmatprep.subr.mxu0 %v720
        %960 = vmatpush1.msra.mxu0 %v719
        %961 = vmatprep.subr.mxu0 %v716
        %962 = vmatpush1.msra.mxu0 %v715
        %963 = vmatprep.subr.mxu0 %v712
        %964 = vmatpush1.msra.mxu0 %v711
        %965 = vmatprep.subr.mxu0 %v708
        %966 = vmatpush1.msra.mxu0 %v707
        %967 = vmatprep.subr.mxu0 %v704
        %968 = vmatpush1.msra.mxu0 %v703
        %969 = vmatprep.subr.mxu0 %v700
        %970 = vmatpush1.msra.mxu0 %v699
        %971 = vmatprep.subr.mxu0 %v696
        %972 = vmatpush1.msra.mxu0 %v695
        %973 = vmatprep.subr.mxu0 %v692
        %974 = vmatpush1.msra.mxu0 %v691
        %975 = vmatprep.subr.mxu0 %v688
        %976 = vmatpush1.msra.mxu0 %v687
        %977 = vmatprep.subr.mxu0 0.0
        %978 = vmatpush2.msra.mxu0 0.0
        %979 = vmatprep.subr.mxu0 0.0
        %980 = vmatpush2.msra.mxu0 0.0
        %981 = vmatprep.subr.mxu0 0.0
        %982 = vmatpush2.msra.mxu0 0.0
        %983 = vmatprep.subr.mxu0 0.0
        %984 = vmatpush2.msra.mxu0 0.0
        %985 = vmatprep.subr.mxu0 0.0
        %986 = vmatpush2.msra.mxu0 0.0
        %987 = vmatprep.subr.mxu0 0.0
        %988 = vmatpush2.msra.mxu0 0.0
        %989 = vmatprep.subr.mxu0 0.0
        %990 = vmatpush2.msra.mxu0 0.0
        %991 = vmatprep.subr.mxu0 0.0
        %992 = vmatpush2.msra.mxu0 0.0
        %993 = vmatprep.subr.mxu0 0.0
        %994 = vmatpush2.msra.mxu0 0.0
        %995 = vmatprep.subr.mxu0 0.0
        %996 = vmatpush2.msra.mxu0 0.0
        %997 = vmatprep.subr.mxu0 0.0
        %998 = vmatpush2.msra.mxu0 0.0
        %999 = vmatprep.subr.mxu0 0.0
        %1000 = vmatpush2.msra.mxu0 0.0
        %1001 = vmatprep.subr.mxu0 0.0
        %1002 = vmatpush2.msra.mxu0 0.0
        %1003 = vmatprep.subr.mxu0 0.0
        %1004 = vmatpush2.msra.mxu0 0.0
        %1005 = vmatprep.subr.mxu0 0.0
        %1006 = vmatpush2.msra.mxu0 0.0
        %1007 = vmatprep.subr.mxu0 0.0
        %1008 = vmatpush2.msra.mxu0 0.0
        %1009 = vmatprep.mubr.f32.mxu0 0.0
        %1010 = vmatmul.mubr.f32.gmra.mxu0 %v930
        %v1011 = vpop.f32.mrf.mxu0
        %v1012 = vadd.f32 0.0, %v1011
        %v1013 = vpop.f32.mrf.mxu0
        %v1014 = vadd.f32 0.0, %v1013
        %1015 = vdwg.mxu0
        %1016 = vmatprep.subr.mxu0 %v750
        %1017 = vmatpush1.msra.mxu0 %v749
        %1018 = vmatprep.subr.mxu0 %v746
        %1019 = vmatpush1.msra.mxu0 %v745
        %1020 = vmatprep.subr.mxu0 %v742
        %1021 = vmatpush1.msra.mxu0 %v741
        %1022 = vmatprep.subr.mxu0 %v738
        %1023 = vmatpush1.msra.mxu0 %v737
        %1024 = vmatprep.subr.mxu0 %v734
        %1025 = vmatpush1.msra.mxu0 %v733
        %1026 = vmatprep.subr.mxu0 %v730
        %1027 = vmatpush1.msra.mxu0 %v729
        %1028 = vmatprep.subr.mxu0 %v726
        %1029 = vmatpush1.msra.mxu0 %v725
        %1030 = vmatprep.subr.mxu0 %v722
        %1031 = vmatpush1.msra.mxu0 %v721
        %1032 = vmatprep.subr.mxu0 %v718
        %1033 = vmatpush1.msra.mxu0 %v717
        %1034 = vmatprep.subr.mxu0 %v714
        %1035 = vmatpush1.msra.mxu0 %v713
        %1036 = vmatprep.subr.mxu0 %v710
        %1037 = vmatpush1.msra.mxu0 %v709
        %1038 = vmatprep.subr.mxu0 %v706
        %1039 = vmatpush1.msra.mxu0 %v705
        %1040 = vmatprep.subr.mxu0 %v702
        %1041 = vmatpush1.msra.mxu0 %v701
        %1042 = vmatprep.subr.mxu0 %v698
        %1043 = vmatpush1.msra.mxu0 %v697
        %1044 = vmatprep.subr.mxu0 %v694
        %1045 = vmatpush1.msra.mxu0 %v693
        %1046 = vmatprep.subr.mxu0 %v690
        %1047 = vmatpush1.msra.mxu0 %v689
        %1048 = vmatprep.subr.mxu0 0.0
        %1049 = vmatpush2.msra.mxu0 0.0
        %1050 = vmatprep.subr.mxu0 0.0
        %1051 = vmatpush2.msra.mxu0 0.0
        %1052 = vmatprep.subr.mxu0 0.0
        %1053 = vmatpush2.msra.mxu0 0.0
        %1054 = vmatprep.subr.mxu0 0.0
        %1055 = vmatpush2.msra.mxu0 0.0
        %1056 = vmatprep.subr.mxu0 0.0
        %1057 = vmatpush2.msra.mxu0 0.0
        %1058 = vmatprep.subr.mxu0 0.0
        %1059 = vmatpush2.msra.mxu0 0.0
        %1060 = vmatprep.subr.mxu0 0.0
        %1061 = vmatpush2.msra.mxu0 0.0
        %1062 = vmatprep.subr.mxu0 0.0
        %1063 = vmatpush2.msra.mxu0 0.0
        %1064 = vmatprep.subr.mxu0 0.0
        %1065 = vmatpush2.msra.mxu0 0.0
        %1066 = vmatprep.subr.mxu0 0.0
        %1067 = vmatpush2.msra.mxu0 0.0
        %1068 = vmatprep.subr.mxu0 0.0
        %1069 = vmatpush2.msra.mxu0 0.0
        %1070 = vmatprep.subr.mxu0 0.0
        %1071 = vmatpush2.msra.mxu0 0.0
        %1072 = vmatprep.subr.mxu0 0.0
        %1073 = vmatpush2.msra.mxu0 0.0
        %1074 = vmatprep.subr.mxu0 0.0
        %1075 = vmatpush2.msra.mxu0 0.0
        %1076 = vmatprep.subr.mxu0 0.0
        %1077 = vmatpush2.msra.mxu0 0.0
        %1078 = vmatprep.subr.mxu0 0.0
        %1079 = vmatpush2.msra.mxu0 0.0
        %1080 = vmatprep.mubr.f32.mxu0 0.0
        %1081 = vmatmul.mubr.f32.gmra.mxu0 %v930
        %v1082 = vpop.f32.mrf.mxu0
        %v1083 = vadd.f32 0.0, %v1082
        %v1084 = vpop.f32.mrf.mxu0
        %v1085 = vadd.f32 0.0, %v1084
        %1086 = vdwg.mxu0
        %v1087 = vadd.f32 %v941, %v1012
        %v1088 = vadd.f32 %v942, %v1014
        %v1089 = vadd.f32 %v943, %v1083
        %v1090 = vadd.f32 %v944, %v1085
        %v1091 = vxor.u32 %v1087, 2147483648
        %v1092 = vmul.f32 %v1091, 1.442695
        %v1093 = vpow.pop %v1092
        %v1094 = vadd.f32 %v1093, 1.0
        %v1095 = vrcp.pop %v1094
        %v1096 = vmul.f32 1.0, %v1095
        %v1097 = vxor.u32 %v1088, 2147483648
        %v1098 = vmul.f32 %v1097, 1.442695
        %v1099 = vpow.pop %v1098
        %v1100 = vadd.f32 %v1099, 1.0
        %v1101 = vrcp.pop %v1100
        %v1102 = vmul.f32 1.0, %v1101
        %v1103 = vtanh.pop %v1089
        %v1104 = vxor.u32 %v1090, 2147483648
        %v1105 = vmul.f32 %v1104, 1.442695
        %v1106 = vpow.pop %v1105
        %v1107 = vadd.f32 %v1106, 1.0
        %v1108 = vrcp.pop %v1107
        %v1109 = vmul.f32 1.0, %v1108
        %v1110 = vmul.f32 %v1102, %v928
        %v1111 = vmul.f32 %v1096, %v1103
        %v1112 = vadd.f32 %v1110, %v1111
        %v1113 = vtanh.pop %v1112
        %v1114 = vmul.f32 %v1109, %v1113
        %s1115 = scalar_lea.vmem [#allocation3], %s935
        %1116 = vst [vmem:[%s1115] sm:$0xff] %v1114
        %s1117 = smul.u32 %s24, 3
        %s1118 = sadd.s32 %s1117, 2
        %s1119 = smul.u32 %s1118, 8
        %s1120 = sshra.s32 %s1119, 3
        %s1121 = sand.u32 %s1119, 7
        %s1122 = smul.u32 %s1120, 4
        %s1123 = smul.addr %s1122, 8
        %s1124 = scalar_lea.vmem [#allocation2], %s1123
        %v1125 = vld [vmem:[%s1124] sm:$0xff]
        %v1126 = vld [vmem:[%s1124 + $0x8] sm:$0xff]
        %v1127 = vld [vmem:[%s1124 + $0x10] sm:$0xff]
        %v1128 = vld [vmem:[%s1124 + $0x18] sm:$0xff]
        %1129 = vmatprep.subr.mxu0 %v748
        %1130 = vmatpush1.msra.mxu0 %v747
        %1131 = vmatprep.subr.mxu0 %v744
        %1132 = vmatpush1.msra.mxu0 %v743
        %1133 = vmatprep.subr.mxu0 %v740
        %1134 = vmatpush1.msra.mxu0 %v739
        %1135 = vmatprep.subr.mxu0 %v736
        %1136 = vmatpush1.msra.mxu0 %v735
        %1137 = vmatprep.subr.mxu0 %v732
        %1138 = vmatpush1.msra.mxu0 %v731
        %1139 = vmatprep.subr.mxu0 %v728
        %1140 = vmatpush1.msra.mxu0 %v727
        %1141 = vmatprep.subr.mxu0 %v724
        %1142 = vmatpush1.msra.mxu0 %v723
        %1143 = vmatprep.subr.mxu0 %v720
        %1144 = vmatpush1.msra.mxu0 %v719
        %1145 = vmatprep.subr.mxu0 %v716
        %1146 = vmatpush1.msra.mxu0 %v715
        %1147 = vmatprep.subr.mxu0 %v712
        %1148 = vmatpush1.msra.mxu0 %v711
        %1149 = vmatprep.subr.mxu0 %v708
        %1150 = vmatpush1.msra.mxu0 %v707
        %1151 = vmatprep.subr.mxu0 %v704
        %1152 = vmatpush1.msra.mxu0 %v703
        %1153 = vmatprep.subr.mxu0 %v700
        %1154 = vmatpush1.msra.mxu0 %v699
        %1155 = vmatprep.subr.mxu0 %v696
        %1156 = vmatpush1.msra.mxu0 %v695
        %1157 = vmatprep.subr.mxu0 %v692
        %1158 = vmatpush1.msra.mxu0 %v691
        %1159 = vmatprep.subr.mxu0 %v688
        %1160 = vmatpush1.msra.mxu0 %v687
        %1161 = vmatprep.subr.mxu0 0.0
        %1162 = vmatpush2.msra.mxu0 0.0
        %1163 = vmatprep.subr.mxu0 0.0
        %1164 = vmatpush2.msra.mxu0 0.0
        %1165 = vmatprep.subr.mxu0 0.0
        %1166 = vmatpush2.msra.mxu0 0.0
        %1167 = vmatprep.subr.mxu0 0.0
        %1168 = vmatpush2.msra.mxu0 0.0
        %1169 = vmatprep.subr.mxu0 0.0
        %1170 = vmatpush2.msra.mxu0 0.0
        %1171 = vmatprep.subr.mxu0 0.0
        %1172 = vmatpush2.msra.mxu0 0.0
        %1173 = vmatprep.subr.mxu0 0.0
        %1174 = vmatpush2.msra.mxu0 0.0
        %1175 = vmatprep.subr.mxu0 0.0
        %1176 = vmatpush2.msra.mxu0 0.0
        %1177 = vmatprep.subr.mxu0 0.0
        %1178 = vmatpush2.msra.mxu0 0.0
        %1179 = vmatprep.subr.mxu0 0.0
        %1180 = vmatpush2.msra.mxu0 0.0
        %1181 = vmatprep.subr.mxu0 0.0
        %1182 = vmatpush2.msra.mxu0 0.0
        %1183 = vmatprep.subr.mxu0 0.0
        %1184 = vmatpush2.msra.mxu0 0.0
        %1185 = vmatprep.subr.mxu0 0.0
        %1186 = vmatpush2.msra.mxu0 0.0
        %1187 = vmatprep.subr.mxu0 0.0
        %1188 = vmatpush2.msra.mxu0 0.0
        %1189 = vmatprep.subr.mxu0 0.0
        %1190 = vmatpush2.msra.mxu0 0.0
        %1191 = vmatprep.subr.mxu0 0.0
        %1192 = vmatpush2.msra.mxu0 0.0
        %1193 = vmatprep.mubr.f32.mxu0 0.0
        %1194 = vmatmul.mubr.f32.gmra.mxu0 %v1114
        %v1195 = vpop.f32.mrf.mxu0
        %v1196 = vadd.f32 0.0, %v1195
        %v1197 = vpop.f32.mrf.mxu0
        %v1198 = vadd.f32 0.0, %v1197
        %1199 = vdwg.mxu0
        %1200 = vmatprep.subr.mxu0 %v750
        %1201 = vmatpush1.msra.mxu0 %v749
        %1202 = vmatprep.subr.mxu0 %v746
        %1203 = vmatpush1.msra.mxu0 %v745
        %1204 = vmatprep.subr.mxu0 %v742
        %1205 = vmatpush1.msra.mxu0 %v741
        %1206 = vmatprep.subr.mxu0 %v738
        %1207 = vmatpush1.msra.mxu0 %v737
        %1208 = vmatprep.subr.mxu0 %v734
        %1209 = vmatpush1.msra.mxu0 %v733
        %1210 = vmatprep.subr.mxu0 %v730
        %1211 = vmatpush1.msra.mxu0 %v729
        %1212 = vmatprep.subr.mxu0 %v726
        %1213 = vmatpush1.msra.mxu0 %v725
        %1214 = vmatprep.subr.mxu0 %v722
        %1215 = vmatpush1.msra.mxu0 %v721
        %1216 = vmatprep.subr.mxu0 %v718
        %1217 = vmatpush1.msra.mxu0 %v717
        %1218 = vmatprep.subr.mxu0 %v714
        %1219 = vmatpush1.msra.mxu0 %v713
        %1220 = vmatprep.subr.mxu0 %v710
        %1221 = vmatpush1.msra.mxu0 %v709
        %1222 = vmatprep.subr.mxu0 %v706
        %1223 = vmatpush1.msra.mxu0 %v705
        %1224 = vmatprep.subr.mxu0 %v702
        %1225 = vmatpush1.msra.mxu0 %v701
        %1226 = vmatprep.subr.mxu0 %v698
        %1227 = vmatpush1.msra.mxu0 %v697
        %1228 = vmatprep.subr.mxu0 %v694
        %1229 = vmatpush1.msra.mxu0 %v693
        %1230 = vmatprep.subr.mxu0 %v690
        %1231 = vmatpush1.msra.mxu0 %v689
        %1232 = vmatprep.subr.mxu0 0.0
        %1233 = vmatpush2.msra.mxu0 0.0
        %1234 = vmatprep.subr.mxu0 0.0
        %1235 = vmatpush2.msra.mxu0 0.0
        %1236 = vmatprep.subr.mxu0 0.0
        %1237 = vmatpush2.msra.mxu0 0.0
        %1238 = vmatprep.subr.mxu0 0.0
        %1239 = vmatpush2.msra.mxu0 0.0
        %1240 = vmatprep.subr.mxu0 0.0
        %1241 = vmatpush2.msra.mxu0 0.0
        %1242 = vmatprep.subr.mxu0 0.0
        %1243 = vmatpush2.msra.mxu0 0.0
        %1244 = vmatprep.subr.mxu0 0.0
        %1245 = vmatpush2.msra.mxu0 0.0
        %1246 = vmatprep.subr.mxu0 0.0
        %1247 = vmatpush2.msra.mxu0 0.0
        %1248 = vmatprep.subr.mxu0 0.0
        %1249 = vmatpush2.msra.mxu0 0.0
        %1250 = vmatprep.subr.mxu0 0.0
        %1251 = vmatpush2.msra.mxu0 0.0
        %1252 = vmatprep.subr.mxu0 0.0
        %1253 = vmatpush2.msra.mxu0 0.0
        %1254 = vmatprep.subr.mxu0 0.0
        %1255 = vmatpush2.msra.mxu0 0.0
        %1256 = vmatprep.subr.mxu0 0.0
        %1257 = vmatpush2.msra.mxu0 0.0
        %1258 = vmatprep.subr.mxu0 0.0
        %1259 = vmatpush2.msra.mxu0 0.0
        %1260 = vmatprep.subr.mxu0 0.0
        %1261 = vmatpush2.msra.mxu0 0.0
        %1262 = vmatprep.subr.mxu0 0.0
        %1263 = vmatpush2.msra.mxu0 0.0
        %1264 = vmatprep.mubr.f32.mxu0 0.0
        %1265 = vmatmul.mubr.f32.gmra.mxu0 %v1114
        %v1266 = vpop.f32.mrf.mxu0
        %v1267 = vadd.f32 0.0, %v1266
        %v1268 = vpop.f32.mrf.mxu0
        %v1269 = vadd.f32 0.0, %v1268
        %1270 = vdwg.mxu0
        %v1271 = vadd.f32 %v1125, %v1196
        %v1272 = vadd.f32 %v1126, %v1198
        %v1273 = vadd.f32 %v1127, %v1267
        %v1274 = vadd.f32 %v1128, %v1269
        %v1275 = vxor.u32 %v1271, 2147483648
        %v1276 = vmul.f32 %v1275, 1.442695
        %v1277 = vpow.pop %v1276
        %v1278 = vadd.f32 %v1277, 1.0
        %v1279 = vrcp.pop %v1278
        %v1280 = vmul.f32 1.0, %v1279
        %v1281 = vxor.u32 %v1272, 2147483648
        %v1282 = vmul.f32 %v1281, 1.442695
        %v1283 = vpow.pop %v1282
        %v1284 = vadd.f32 %v1283, 1.0
        %v1285 = vrcp.pop %v1284
        %v1286 = vmul.f32 1.0, %v1285
        %v1287 = vtanh.pop %v1273
        %v1288 = vxor.u32 %v1274, 2147483648
        %v1289 = vmul.f32 %v1288, 1.442695
        %v1290 = vpow.pop %v1289
        %v1291 = vadd.f32 %v1290, 1.0
        %v1292 = vrcp.pop %v1291
        %v1293 = vmul.f32 1.0, %v1292
        %v1294 = vmul.f32 %v1286, %v1112
        %v1295 = vmul.f32 %v1280, %v1287
        %v1296 = vadd.f32 %v1294, %v1295
        %v1297 = vtanh.pop %v1296
        %v1298 = vmul.f32 %v1293, %v1297
        %s1299 = scalar_lea.vmem [#allocation3], %s1119
        %1300 = vst [vmem:[%s1299] sm:$0xff] %v1298
        %s1301 = sadd.s32 %s24, 3
        %s1302 = smul.u32 %s1301, 8
        %s1303 = sshra.s32 %s1302, 3
        %s1304 = sand.u32 %s1302, 7
        %s1305 = smul.u32 %s1303, 4
        %s1306 = smul.addr %s1305, 8
        %s1307 = scalar_lea.vmem [#allocation2], %s1306
        %v1308 = vld [vmem:[%s1307] sm:$0xff]
        %v1309 = vld [vmem:[%s1307 + $0x8] sm:$0xff]
        %v1310 = vld [vmem:[%s1307 + $0x10] sm:$0xff]
        %v1311 = vld [vmem:[%s1307 + $0x18] sm:$0xff]
        %1312 = vmatprep.subr.mxu0 %v748
        %1313 = vmatpush1.msra.mxu0 %v747
        %1314 = vmatprep.subr.mxu0 %v744
        %1315 = vmatpush1.msra.mxu0 %v743
        %1316 = vmatprep.subr.mxu0 %v740
        %1317 = vmatpush1.msra.mxu0 %v739
        %1318 = vmatprep.subr.mxu0 %v736
        %1319 = vmatpush1.msra.mxu0 %v735
        %1320 = vmatprep.subr.mxu0 %v732
        %1321 = vmatpush1.msra.mxu0 %v731
        %1322 = vmatprep.subr.mxu0 %v728
        %1323 = vmatpush1.msra.mxu0 %v727
        %1324 = vmatprep.subr.mxu0 %v724
        %1325 = vmatpush1.msra.mxu0 %v723
        %1326 = vmatprep.subr.mxu0 %v720
        %1327 = vmatpush1.msra.mxu0 %v719
        %1328 = vmatprep.subr.mxu0 %v716
        %1329 = vmatpush1.msra.mxu0 %v715
        %1330 = vmatprep.subr.mxu0 %v712
        %1331 = vmatpush1.msra.mxu0 %v711
        %1332 = vmatprep.subr.mxu0 %v708
        %1333 = vmatpush1.msra.mxu0 %v707
        %1334 = vmatprep.subr.mxu0 %v704
        %1335 = vmatpush1.msra.mxu0 %v703
        %1336 = vmatprep.subr.mxu0 %v700
        %1337 = vmatpush1.msra.mxu0 %v699
        %1338 = vmatprep.subr.mxu0 %v696
        %1339 = vmatpush1.msra.mxu0 %v695
        %1340 = vmatprep.subr.mxu0 %v692
        %1341 = vmatpush1.msra.mxu0 %v691
        %1342 = vmatprep.subr.mxu0 %v688
        %1343 = vmatpush1.msra.mxu0 %v687
        %1344 = vmatprep.subr.mxu0 0.0
        %1345 = vmatpush2.msra.mxu0 0.0
        %1346 = vmatprep.subr.mxu0 0.0
        %1347 = vmatpush2.msra.mxu0 0.0
        %1348 = vmatprep.subr.mxu0 0.0
        %1349 = vmatpush2.msra.mxu0 0.0
        %1350 = vmatprep.subr.mxu0 0.0
        %1351 = vmatpush2.msra.mxu0 0.0
        %1352 = vmatprep.subr.mxu0 0.0
        %1353 = vmatpush2.msra.mxu0 0.0
        %1354 = vmatprep.subr.mxu0 0.0
        %1355 = vmatpush2.msra.mxu0 0.0
        %1356 = vmatprep.subr.mxu0 0.0
        %1357 = vmatpush2.msra.mxu0 0.0
        %1358 = vmatprep.subr.mxu0 0.0
        %1359 = vmatpush2.msra.mxu0 0.0
        %1360 = vmatprep.subr.mxu0 0.0
        %1361 = vmatpush2.msra.mxu0 0.0
        %1362 = vmatprep.subr.mxu0 0.0
        %1363 = vmatpush2.msra.mxu0 0.0
        %1364 = vmatprep.subr.mxu0 0.0
        %1365 = vmatpush2.msra.mxu0 0.0
        %1366 = vmatprep.subr.mxu0 0.0
        %1367 = vmatpush2.msra.mxu0 0.0
        %1368 = vmatprep.subr.mxu0 0.0
        %1369 = vmatpush2.msra.mxu0 0.0
        %1370 = vmatprep.subr.mxu0 0.0
        %1371 = vmatpush2.msra.mxu0 0.0
        %1372 = vmatprep.subr.mxu0 0.0
        %1373 = vmatpush2.msra.mxu0 0.0
        %1374 = vmatprep.subr.mxu0 0.0
        %1375 = vmatpush2.msra.mxu0 0.0
        %1376 = vmatprep.mubr.f32.mxu0 0.0
        %1377 = vmatmul.mubr.f32.gmra.mxu0 %v1298
        %v1378 = vpop.f32.mrf.mxu0
        %v1379 = vadd.f32 0.0, %v1378
        %v1380 = vpop.f32.mrf.mxu0
        %v1381 = vadd.f32 0.0, %v1380
        %1382 = vdwg.mxu0
        %1383 = vmatprep.subr.mxu0 %v750
        %1384 = vmatpush1.msra.mxu0 %v749
        %1385 = vmatprep.subr.mxu0 %v746
        %1386 = vmatpush1.msra.mxu0 %v745
        %1387 = vmatprep.subr.mxu0 %v742
        %1388 = vmatpush1.msra.mxu0 %v741
        %1389 = vmatprep.subr.mxu0 %v738
        %1390 = vmatpush1.msra.mxu0 %v737
        %1391 = vmatprep.subr.mxu0 %v734
        %1392 = vmatpush1.msra.mxu0 %v733
        %1393 = vmatprep.subr.mxu0 %v730
        %1394 = vmatpush1.msra.mxu0 %v729
        %1395 = vmatprep.subr.mxu0 %v726
        %1396 = vmatpush1.msra.mxu0 %v725
        %1397 = vmatprep.subr.mxu0 %v722
        %1398 = vmatpush1.msra.mxu0 %v721
        %1399 = vmatprep.subr.mxu0 %v718
        %1400 = vmatpush1.msra.mxu0 %v717
        %1401 = vmatprep.subr.mxu0 %v714
        %1402 = vmatpush1.msra.mxu0 %v713
        %1403 = vmatprep.subr.mxu0 %v710
        %1404 = vmatpush1.msra.mxu0 %v709
        %1405 = vmatprep.subr.mxu0 %v706
        %1406 = vmatpush1.msra.mxu0 %v705
        %1407 = vmatprep.subr.mxu0 %v702
        %1408 = vmatpush1.msra.mxu0 %v701
        %1409 = vmatprep.subr.mxu0 %v698
        %1410 = vmatpush1.msra.mxu0 %v697
        %1411 = vmatprep.subr.mxu0 %v694
        %1412 = vmatpush1.msra.mxu0 %v693
        %1413 = vmatprep.subr.mxu0 %v690
        %1414 = vmatpush1.msra.mxu0 %v689
        %1415 = vmatprep.subr.mxu0 0.0
        %1416 = vmatpush2.msra.mxu0 0.0
        %1417 = vmatprep.subr.mxu0 0.0
        %1418 = vmatpush2.msra.mxu0 0.0
        %1419 = vmatprep.subr.mxu0 0.0
        %1420 = vmatpush2.msra.mxu0 0.0
        %1421 = vmatprep.subr.mxu0 0.0
        %1422 = vmatpush2.msra.mxu0 0.0
        %1423 = vmatprep.subr.mxu0 0.0
        %1424 = vmatpush2.msra.mxu0 0.0
        %1425 = vmatprep.subr.mxu0 0.0
        %1426 = vmatpush2.msra.mxu0 0.0
        %1427 = vmatprep.subr.mxu0 0.0
        %1428 = vmatpush2.msra.mxu0 0.0
        %1429 = vmatprep.subr.mxu0 0.0
        %1430 = vmatpush2.msra.mxu0 0.0
        %1431 = vmatprep.subr.mxu0 0.0
        %1432 = vmatpush2.msra.mxu0 0.0
        %1433 = vmatprep.subr.mxu0 0.0
        %1434 = vmatpush2.msra.mxu0 0.0
        %1435 = vmatprep.subr.mxu0 0.0
        %1436 = vmatpush2.msra.mxu0 0.0
        %1437 = vmatprep.subr.mxu0 0.0
        %1438 = vmatpush2.msra.mxu0 0.0
        %1439 = vmatprep.subr.mxu0 0.0
        %1440 = vmatpush2.msra.mxu0 0.0
        %1441 = vmatprep.subr.mxu0 0.0
        %1442 = vmatpush2.msra.mxu0 0.0
        %1443 = vmatprep.subr.mxu0 0.0
        %1444 = vmatpush2.msra.mxu0 0.0
        %1445 = vmatprep.subr.mxu0 0.0
        %1446 = vmatpush2.msra.mxu0 0.0
        %1447 = vmatprep.mubr.f32.mxu0 0.0
        %1448 = vmatmul.mubr.f32.gmra.mxu0 %v1298
        %v1449 = vpop.f32.mrf.mxu0
        %v1450 = vadd.f32 0.0, %v1449
        %v1451 = vpop.f32.mrf.mxu0
        %v1452 = vadd.f32 0.0, %v1451
        %1453 = vdwg.mxu0
        %v1454 = vadd.f32 %v1308, %v1379
        %v1455 = vadd.f32 %v1309, %v1381
        %v1456 = vadd.f32 %v1310, %v1450
        %v1457 = vadd.f32 %v1311, %v1452
        %v1458 = vxor.u32 %v1454, 2147483648
        %v1459 = vmul.f32 %v1458, 1.442695
        %v1460 = vpow.pop %v1459
        %v1461 = vadd.f32 %v1460, 1.0
        %v1462 = vrcp.pop %v1461
        %v1463 = vmul.f32 1.0, %v1462
        %v1464 = vxor.u32 %v1455, 2147483648
        %v1465 = vmul.f32 %v1464, 1.442695
        %v1466 = vpow.pop %v1465
        %v1467 = vadd.f32 %v1466, 1.0
        %v1468 = vrcp.pop %v1467
        %v1469 = vmul.f32 1.0, %v1468
        %v1470 = vtanh.pop %v1456
        %v1471 = vxor.u32 %v1457, 2147483648
        %v1472 = vmul.f32 %v1471, 1.442695
        %v1473 = vpow.pop %v1472
        %v1474 = vadd.f32 %v1473, 1.0
        %v1475 = vrcp.pop %v1474
        %v1476 = vmul.f32 1.0, %v1475
        %v1477 = vmul.f32 %v1469, %v1296
        %v1478 = vmul.f32 %v1463, %v1470
        %v1479 = vadd.f32 %v1477, %v1478
        %v1480 = vtanh.pop %v1479
        %v1481 = vmul.f32 %v1476, %v1480
        %s1482 = scalar_lea.vmem [#allocation3], %s1302
        %1483 = vst [vmem:[%s1482] sm:$0xff] %v1481
        %s1484 = ssub.s32 4, %s24
        %s1485 = smul.u32 %s1484, 8
        %s1486 = sshra.s32 %s1485, 3
        %s1487 = sand.u32 %s1485, 7
        %s1488 = smul.u32 %s1486, 4
        %s1489 = smul.addr %s1488, 8
        %s1490 = scalar_lea.vmem [#allocation2], %s1489
        %v1491 = vld [vmem:[%s1490] sm:$0xff]
        %v1492 = vld [vmem:[%s1490 + $0x8] sm:$0xff]
        %v1493 = vld [vmem:[%s1490 + $0x10] sm:$0xff]
        %v1494 = vld [vmem:[%s1490 + $0x18] sm:$0xff]
        %1495 = vmatprep.subr.mxu0 %v748
        %1496 = vmatpush1.msra.mxu0 %v747
        %1497 = vmatprep.subr.mxu0 %v744
        %1498 = vmatpush1.msra.mxu0 %v743
        %1499 = vmatprep.subr.mxu0 %v740
        %1500 = vmatpush1.msra.mxu0 %v739
        %1501 = vmatprep.subr.mxu0 %v736
        %1502 = vmatpush1.msra.mxu0 %v735
        %1503 = vmatprep.subr.mxu0 %v732
        %1504 = vmatpush1.msra.mxu0 %v731
        %1505 = vmatprep.subr.mxu0 %v728
        %1506 = vmatpush1.msra.mxu0 %v727
        %1507 = vmatprep.subr.mxu0 %v724
        %1508 = vmatpush1.msra.mxu0 %v723
        %1509 = vmatprep.subr.mxu0 %v720
        %1510 = vmatpush1.msra.mxu0 %v719
        %1511 = vmatprep.subr.mxu0 %v716
        %1512 = vmatpush1.msra.mxu0 %v715
        %1513 = vmatprep.subr.mxu0 %v712
        %1514 = vmatpush1.msra.mxu0 %v711
        %1515 = vmatprep.subr.mxu0 %v708
        %1516 = vmatpush1.msra.mxu0 %v707
        %1517 = vmatprep.subr.mxu0 %v704
        %1518 = vmatpush1.msra.mxu0 %v703
        %1519 = vmatprep.subr.mxu0 %v700
        %1520 = vmatpush1.msra.mxu0 %v699
        %1521 = vmatprep.subr.mxu0 %v696
        %1522 = vmatpush1.msra.mxu0 %v695
        %1523 = vmatprep.subr.mxu0 %v692
        %1524 = vmatpush1.msra.mxu0 %v691
        %1525 = vmatprep.subr.mxu0 %v688
        %1526 = vmatpush1.msra.mxu0 %v687
        %1527 = vmatprep.subr.mxu0 0.0
        %1528 = vmatpush2.msra.mxu0 0.0
        %1529 = vmatprep.subr.mxu0 0.0
        %1530 = vmatpush2.msra.mxu0 0.0
        %1531 = vmatprep.subr.mxu0 0.0
        %1532 = vmatpush2.msra.mxu0 0.0
        %1533 = vmatprep.subr.mxu0 0.0
        %1534 = vmatpush2.msra.mxu0 0.0
        %1535 = vmatprep.subr.mxu0 0.0
        %1536 = vmatpush2.msra.mxu0 0.0
        %1537 = vmatprep.subr.mxu0 0.0
        %1538 = vmatpush2.msra.mxu0 0.0
        %1539 = vmatprep.subr.mxu0 0.0
        %1540 = vmatpush2.msra.mxu0 0.0
        %1541 = vmatprep.subr.mxu0 0.0
        %1542 = vmatpush2.msra.mxu0 0.0
        %1543 = vmatprep.subr.mxu0 0.0
        %1544 = vmatpush2.msra.mxu0 0.0
        %1545 = vmatprep.subr.mxu0 0.0
        %1546 = vmatpush2.msra.mxu0 0.0
        %1547 = vmatprep.subr.mxu0 0.0
        %1548 = vmatpush2.msra.mxu0 0.0
        %1549 = vmatprep.subr.mxu0 0.0
        %1550 = vmatpush2.msra.mxu0 0.0
        %1551 = vmatprep.subr.mxu0 0.0
        %1552 = vmatpush2.msra.mxu0 0.0
        %1553 = vmatprep.subr.mxu0 0.0
        %1554 = vmatpush2.msra.mxu0 0.0
        %1555 = vmatprep.subr.mxu0 0.0
        %1556 = vmatpush2.msra.mxu0 0.0
        %1557 = vmatprep.subr.mxu0 0.0
        %1558 = vmatpush2.msra.mxu0 0.0
        %1559 = vmatprep.mubr.f32.mxu0 0.0
        %1560 = vmatmul.mubr.f32.gmra.mxu0 %v1481
        %v1561 = vpop.f32.mrf.mxu0
        %v1562 = vadd.f32 0.0, %v1561
        %v1563 = vpop.f32.mrf.mxu0
        %v1564 = vadd.f32 0.0, %v1563
        %1565 = vdwg.mxu0
        %1566 = vmatprep.subr.mxu0 %v750
        %1567 = vmatpush1.msra.mxu0 %v749
        %1568 = vmatprep.subr.mxu0 %v746
        %1569 = vmatpush1.msra.mxu0 %v745
        %1570 = vmatprep.subr.mxu0 %v742
        %1571 = vmatpush1.msra.mxu0 %v741
        %1572 = vmatprep.subr.mxu0 %v738
        %1573 = vmatpush1.msra.mxu0 %v737
        %1574 = vmatprep.subr.mxu0 %v734
        %1575 = vmatpush1.msra.mxu0 %v733
        %1576 = vmatprep.subr.mxu0 %v730
        %1577 = vmatpush1.msra.mxu0 %v729
        %1578 = vmatprep.subr.mxu0 %v726
        %1579 = vmatpush1.msra.mxu0 %v725
        %1580 = vmatprep.subr.mxu0 %v722
        %1581 = vmatpush1.msra.mxu0 %v721
        %1582 = vmatprep.subr.mxu0 %v718
        %1583 = vmatpush1.msra.mxu0 %v717
        %1584 = vmatprep.subr.mxu0 %v714
        %1585 = vmatpush1.msra.mxu0 %v713
        %1586 = vmatprep.subr.mxu0 %v710
        %1587 = vmatpush1.msra.mxu0 %v709
        %1588 = vmatprep.subr.mxu0 %v706
        %1589 = vmatpush1.msra.mxu0 %v705
        %1590 = vmatprep.subr.mxu0 %v702
        %1591 = vmatpush1.msra.mxu0 %v701
        %1592 = vmatprep.subr.mxu0 %v698
        %1593 = vmatpush1.msra.mxu0 %v697
        %1594 = vmatprep.subr.mxu0 %v694
        %1595 = vmatpush1.msra.mxu0 %v693
        %1596 = vmatprep.subr.mxu0 %v690
        %1597 = vmatpush1.msra.mxu0 %v689
        %1598 = vmatprep.subr.mxu0 0.0
        %1599 = vmatpush2.msra.mxu0 0.0
        %1600 = vmatprep.subr.mxu0 0.0
        %1601 = vmatpush2.msra.mxu0 0.0
        %1602 = vmatprep.subr.mxu0 0.0
        %1603 = vmatpush2.msra.mxu0 0.0
        %1604 = vmatprep.subr.mxu0 0.0
        %1605 = vmatpush2.msra.mxu0 0.0
        %1606 = vmatprep.subr.mxu0 0.0
        %1607 = vmatpush2.msra.mxu0 0.0
        %1608 = vmatprep.subr.mxu0 0.0
        %1609 = vmatpush2.msra.mxu0 0.0
        %1610 = vmatprep.subr.mxu0 0.0
        %1611 = vmatpush2.msra.mxu0 0.0
        %1612 = vmatprep.subr.mxu0 0.0
        %1613 = vmatpush2.msra.mxu0 0.0
        %1614 = vmatprep.subr.mxu0 0.0
        %1615 = vmatpush2.msra.mxu0 0.0
        %1616 = vmatprep.subr.mxu0 0.0
        %1617 = vmatpush2.msra.mxu0 0.0
        %1618 = vmatprep.subr.mxu0 0.0
        %1619 = vmatpush2.msra.mxu0 0.0
        %1620 = vmatprep.subr.mxu0 0.0
        %1621 = vmatpush2.msra.mxu0 0.0
        %1622 = vmatprep.subr.mxu0 0.0
        %1623 = vmatpush2.msra.mxu0 0.0
        %1624 = vmatprep.subr.mxu0 0.0
        %1625 = vmatpush2.msra.mxu0 0.0
        %1626 = vmatprep.subr.mxu0 0.0
        %1627 = vmatpush2.msra.mxu0 0.0
        %1628 = vmatprep.subr.mxu0 0.0
        %1629 = vmatpush2.msra.mxu0 0.0
        %1630 = vmatprep.mubr.f32.mxu0 0.0
        %1631 = vmatmul.mubr.f32.gmra.mxu0 %v1481
        %v1632 = vpop.f32.mrf.mxu0
        %v1633 = vadd.f32 0.0, %v1632
        %v1634 = vpop.f32.mrf.mxu0
        %v1635 = vadd.f32 0.0, %v1634
        %1636 = vdwg.mxu0
        %v1637 = vadd.f32 %v1491, %v1562
        %v1638 = vadd.f32 %v1492, %v1564
        %v1639 = vadd.f32 %v1493, %v1633
        %v1640 = vadd.f32 %v1494, %v1635
        %v1641 = vxor.u32 %v1637, 2147483648
        %v1642 = vmul.f32 %v1641, 1.442695
        %v1643 = vpow.pop %v1642
        %v1644 = vadd.f32 %v1643, 1.0
        %v1645 = vrcp.pop %v1644
        %v1646 = vmul.f32 1.0, %v1645
        %v1647 = vxor.u32 %v1638, 2147483648
        %v1648 = vmul.f32 %v1647, 1.442695
        %v1649 = vpow.pop %v1648
        %v1650 = vadd.f32 %v1649, 1.0
        %v1651 = vrcp.pop %v1650
        %v1652 = vmul.f32 1.0, %v1651
        %v1653 = vtanh.pop %v1639
        %v1654 = vxor.u32 %v1640, 2147483648
        %v1655 = vmul.f32 %v1654, 1.442695
        %v1656 = vpow.pop %v1655
        %v1657 = vadd.f32 %v1656, 1.0
        %v1658 = vrcp.pop %v1657
        %v1659 = vmul.f32 1.0, %v1658
        %v1660 = vmul.f32 %v1652, %v1479
        %v1661 = vmul.f32 %v1646, %v1653
        %v1662 = vadd.f32 %v1660, %v1661
        %v1663 = vtanh.pop %v1662
        %v1664 = vmul.f32 %v1659, %v1663
        %s1665 = scalar_lea.vmem [#allocation3], %s1485
        %1666 = vst [vmem:[%s1665] sm:$0xff] %v1664
        %s1667 = smul.u32 %s24, 4294967293
        %s1668 = sadd.s32 %s1667, 5
        %s1669 = smul.u32 %s1668, 8
        %s1670 = sshra.s32 %s1669, 3
        %s1671 = sand.u32 %s1669, 7
        %s1672 = smul.u32 %s1670, 4
        %s1673 = smul.addr %s1672, 8
        %s1674 = scalar_lea.vmem [#allocation2], %s1673
        %v1675 = vld [vmem:[%s1674] sm:$0xff]
        %v1676 = vld [vmem:[%s1674 + $0x8] sm:$0xff]
        %v1677 = vld [vmem:[%s1674 + $0x10] sm:$0xff]
        %v1678 = vld [vmem:[%s1674 + $0x18] sm:$0xff]
        %1679 = vmatprep.subr.mxu0 %v748
        %1680 = vmatpush1.msra.mxu0 %v747
        %1681 = vmatprep.subr.mxu0 %v744
        %1682 = vmatpush1.msra.mxu0 %v743
        %1683 = vmatprep.subr.mxu0 %v740
        %1684 = vmatpush1.msra.mxu0 %v739
        %1685 = vmatprep.subr.mxu0 %v736
        %1686 = vmatpush1.msra.mxu0 %v735
        %1687 = vmatprep.subr.mxu0 %v732
        %1688 = vmatpush1.msra.mxu0 %v731
        %1689 = vmatprep.subr.mxu0 %v728
        %1690 = vmatpush1.msra.mxu0 %v727
        %1691 = vmatprep.subr.mxu0 %v724
        %1692 = vmatpush1.msra.mxu0 %v723
        %1693 = vmatprep.subr.mxu0 %v720
        %1694 = vmatpush1.msra.mxu0 %v719
        %1695 = vmatprep.subr.mxu0 %v716
        %1696 = vmatpush1.msra.mxu0 %v715
        %1697 = vmatprep.subr.mxu0 %v712
        %1698 = vmatpush1.msra.mxu0 %v711
        %1699 = vmatprep.subr.mxu0 %v708
        %1700 = vmatpush1.msra.mxu0 %v707
        %1701 = vmatprep.subr.mxu0 %v704
        %1702 = vmatpush1.msra.mxu0 %v703
        %1703 = vmatprep.subr.mxu0 %v700
        %1704 = vmatpush1.msra.mxu0 %v699
        %1705 = vmatprep.subr.mxu0 %v696
        %1706 = vmatpush1.msra.mxu0 %v695
        %1707 = vmatprep.subr.mxu0 %v692
        %1708 = vmatpush1.msra.mxu0 %v691
        %1709 = vmatprep.subr.mxu0 %v688
        %1710 = vmatpush1.msra.mxu0 %v687
        %1711 = vmatprep.subr.mxu0 0.0
        %1712 = vmatpush2.msra.mxu0 0.0
        %1713 = vmatprep.subr.mxu0 0.0
        %1714 = vmatpush2.msra.mxu0 0.0
        %1715 = vmatprep.subr.mxu0 0.0
        %1716 = vmatpush2.msra.mxu0 0.0
        %1717 = vmatprep.subr.mxu0 0.0
        %1718 = vmatpush2.msra.mxu0 0.0
        %1719 = vmatprep.subr.mxu0 0.0
        %1720 = vmatpush2.msra.mxu0 0.0
        %1721 = vmatprep.subr.mxu0 0.0
        %1722 = vmatpush2.msra.mxu0 0.0
        %1723 = vmatprep.subr.mxu0 0.0
        %1724 = vmatpush2.msra.mxu0 0.0
        %1725 = vmatprep.subr.mxu0 0.0
        %1726 = vmatpush2.msra.mxu0 0.0
        %1727 = vmatprep.subr.mxu0 0.0
        %1728 = vmatpush2.msra.mxu0 0.0
        %1729 = vmatprep.subr.mxu0 0.0
        %1730 = vmatpush2.msra.mxu0 0.0
        %1731 = vmatprep.subr.mxu0 0.0
        %1732 = vmatpush2.msra.mxu0 0.0
        %1733 = vmatprep.subr.mxu0 0.0
        %1734 = vmatpush2.msra.mxu0 0.0
        %1735 = vmatprep.subr.mxu0 0.0
        %1736 = vmatpush2.msra.mxu0 0.0
        %1737 = vmatprep.subr.mxu0 0.0
        %1738 = vmatpush2.msra.mxu0 0.0
        %1739 = vmatprep.subr.mxu0 0.0
        %1740 = vmatpush2.msra.mxu0 0.0
        %1741 = vmatprep.subr.mxu0 0.0
        %1742 = vmatpush2.msra.mxu0 0.0
        %1743 = vmatprep.mubr.f32.mxu0 0.0
        %1744 = vmatmul.mubr.f32.gmra.mxu0 %v1664
        %v1745 = vpop.f32.mrf.mxu0
        %v1746 = vadd.f32 0.0, %v1745
        %v1747 = vpop.f32.mrf.mxu0
        %v1748 = vadd.f32 0.0, %v1747
        %1749 = vdwg.mxu0
        %1750 = vmatprep.subr.mxu0 %v750
        %1751 = vmatpush1.msra.mxu0 %v749
        %1752 = vmatprep.subr.mxu0 %v746
        %1753 = vmatpush1.msra.mxu0 %v745
        %1754 = vmatprep.subr.mxu0 %v742
        %1755 = vmatpush1.msra.mxu0 %v741
        %1756 = vmatprep.subr.mxu0 %v738
        %1757 = vmatpush1.msra.mxu0 %v737
        %1758 = vmatprep.subr.mxu0 %v734
        %1759 = vmatpush1.msra.mxu0 %v733
        %1760 = vmatprep.subr.mxu0 %v730
        %1761 = vmatpush1.msra.mxu0 %v729
        %1762 = vmatprep.subr.mxu0 %v726
        %1763 = vmatpush1.msra.mxu0 %v725
        %1764 = vmatprep.subr.mxu0 %v722
        %1765 = vmatpush1.msra.mxu0 %v721
        %1766 = vmatprep.subr.mxu0 %v718
        %1767 = vmatpush1.msra.mxu0 %v717
        %1768 = vmatprep.subr.mxu0 %v714
        %1769 = vmatpush1.msra.mxu0 %v713
        %1770 = vmatprep.subr.mxu0 %v710
        %1771 = vmatpush1.msra.mxu0 %v709
        %1772 = vmatprep.subr.mxu0 %v706
        %1773 = vmatpush1.msra.mxu0 %v705
        %1774 = vmatprep.subr.mxu0 %v702
        %1775 = vmatpush1.msra.mxu0 %v701
        %1776 = vmatprep.subr.mxu0 %v698
        %1777 = vmatpush1.msra.mxu0 %v697
        %1778 = vmatprep.subr.mxu0 %v694
        %1779 = vmatpush1.msra.mxu0 %v693
        %1780 = vmatprep.subr.mxu0 %v690
        %1781 = vmatpush1.msra.mxu0 %v689
        %1782 = vmatprep.subr.mxu0 0.0
        %1783 = vmatpush2.msra.mxu0 0.0
        %1784 = vmatprep.subr.mxu0 0.0
        %1785 = vmatpush2.msra.mxu0 0.0
        %1786 = vmatprep.subr.mxu0 0.0
        %1787 = vmatpush2.msra.mxu0 0.0
        %1788 = vmatprep.subr.mxu0 0.0
        %1789 = vmatpush2.msra.mxu0 0.0
        %1790 = vmatprep.subr.mxu0 0.0
        %1791 = vmatpush2.msra.mxu0 0.0
        %1792 = vmatprep.subr.mxu0 0.0
        %1793 = vmatpush2.msra.mxu0 0.0
        %1794 = vmatprep.subr.mxu0 0.0
        %1795 = vmatpush2.msra.mxu0 0.0
        %1796 = vmatprep.subr.mxu0 0.0
        %1797 = vmatpush2.msra.mxu0 0.0
        %1798 = vmatprep.subr.mxu0 0.0
        %1799 = vmatpush2.msra.mxu0 0.0
        %1800 = vmatprep.subr.mxu0 0.0
        %1801 = vmatpush2.msra.mxu0 0.0
        %1802 = vmatprep.subr.mxu0 0.0
        %1803 = vmatpush2.msra.mxu0 0.0
        %1804 = vmatprep.subr.mxu0 0.0
        %1805 = vmatpush2.msra.mxu0 0.0
        %1806 = vmatprep.subr.mxu0 0.0
        %1807 = vmatpush2.msra.mxu0 0.0
        %1808 = vmatprep.subr.mxu0 0.0
        %1809 = vmatpush2.msra.mxu0 0.0
        %1810 = vmatprep.subr.mxu0 0.0
        %1811 = vmatpush2.msra.mxu0 0.0
        %1812 = vmatprep.subr.mxu0 0.0
        %1813 = vmatpush2.msra.mxu0 0.0
        %1814 = vmatprep.mubr.f32.mxu0 0.0
        %1815 = vmatmul.mubr.f32.gmra.mxu0 %v1664
        %v1816 = vpop.f32.mrf.mxu0
        %v1817 = vadd.f32 0.0, %v1816
        %v1818 = vpop.f32.mrf.mxu0
        %v1819 = vadd.f32 0.0, %v1818
        %1820 = vdwg.mxu0
        %v1821 = vadd.f32 %v1675, %v1746
        %v1822 = vadd.f32 %v1676, %v1748
        %v1823 = vadd.f32 %v1677, %v1817
        %v1824 = vadd.f32 %v1678, %v1819
        %v1825 = vxor.u32 %v1821, 2147483648
        %v1826 = vmul.f32 %v1825, 1.442695
        %v1827 = vpow.pop %v1826
        %v1828 = vadd.f32 %v1827, 1.0
        %v1829 = vrcp.pop %v1828
        %v1830 = vmul.f32 1.0, %v1829
        %v1831 = vxor.u32 %v1822, 2147483648
        %v1832 = vmul.f32 %v1831, 1.442695
        %v1833 = vpow.pop %v1832
        %v1834 = vadd.f32 %v1833, 1.0
        %v1835 = vrcp.pop %v1834
        %v1836 = vmul.f32 1.0, %v1835
        %v1837 = vtanh.pop %v1823
        %v1838 = vxor.u32 %v1824, 2147483648
        %v1839 = vmul.f32 %v1838, 1.442695
        %v1840 = vpow.pop %v1839
        %v1841 = vadd.f32 %v1840, 1.0
        %v1842 = vrcp.pop %v1841
        %v1843 = vmul.f32 1.0, %v1842
        %v1844 = vmul.f32 %v1836, %v1662
        %v1845 = vmul.f32 %v1830, %v1837
        %v1846 = vadd.f32 %v1844, %v1845
        %v1847 = vtanh.pop %v1846
        %v1848 = vmul.f32 %v1843, %v1847
        %s1849 = scalar_lea.vmem [#allocation3], %s1669
        %1850 = vst [vmem:[%s1849] sm:$0xff] %v1848
        %s1851 = smul.u32 %s24, 4294967291
        %s1852 = sadd.s32 %s1851, 6
        %s1853 = smul.u32 %s1852, 8
        %s1854 = sshra.s32 %s1853, 3
        %s1855 = sand.u32 %s1853, 7
        %s1856 = smul.u32 %s1854, 4
        %s1857 = smul.addr %s1856, 8
        %s1858 = scalar_lea.vmem [#allocation2], %s1857
        %v1859 = vld [vmem:[%s1858] sm:$0xff]
        %v1860 = vld [vmem:[%s1858 + $0x8] sm:$0xff]
        %v1861 = vld [vmem:[%s1858 + $0x10] sm:$0xff]
        %v1862 = vld [vmem:[%s1858 + $0x18] sm:$0xff]
        %1863 = vmatprep.subr.mxu0 %v748
        %1864 = vmatpush1.msra.mxu0 %v747
        %1865 = vmatprep.subr.mxu0 %v744
        %1866 = vmatpush1.msra.mxu0 %v743
        %1867 = vmatprep.subr.mxu0 %v740
        %1868 = vmatpush1.msra.mxu0 %v739
        %1869 = vmatprep.subr.mxu0 %v736
        %1870 = vmatpush1.msra.mxu0 %v735
        %1871 = vmatprep.subr.mxu0 %v732
        %1872 = vmatpush1.msra.mxu0 %v731
        %1873 = vmatprep.subr.mxu0 %v728
        %1874 = vmatpush1.msra.mxu0 %v727
        %1875 = vmatprep.subr.mxu0 %v724
        %1876 = vmatpush1.msra.mxu0 %v723
        %1877 = vmatprep.subr.mxu0 %v720
        %1878 = vmatpush1.msra.mxu0 %v719
        %1879 = vmatprep.subr.mxu0 %v716
        %1880 = vmatpush1.msra.mxu0 %v715
        %1881 = vmatprep.subr.mxu0 %v712
        %1882 = vmatpush1.msra.mxu0 %v711
        %1883 = vmatprep.subr.mxu0 %v708
        %1884 = vmatpush1.msra.mxu0 %v707
        %1885 = vmatprep.subr.mxu0 %v704
        %1886 = vmatpush1.msra.mxu0 %v703
        %1887 = vmatprep.subr.mxu0 %v700
        %1888 = vmatpush1.msra.mxu0 %v699
        %1889 = vmatprep.subr.mxu0 %v696
        %1890 = vmatpush1.msra.mxu0 %v695
        %1891 = vmatprep.subr.mxu0 %v692
        %1892 = vmatpush1.msra.mxu0 %v691
        %1893 = vmatprep.subr.mxu0 %v688
        %1894 = vmatpush1.msra.mxu0 %v687
        %1895 = vmatprep.subr.mxu0 0.0
        %1896 = vmatpush2.msra.mxu0 0.0
        %1897 = vmatprep.subr.mxu0 0.0
        %1898 = vmatpush2.msra.mxu0 0.0
        %1899 = vmatprep.subr.mxu0 0.0
        %1900 = vmatpush2.msra.mxu0 0.0
        %1901 = vmatprep.subr.mxu0 0.0
        %1902 = vmatpush2.msra.mxu0 0.0
        %1903 = vmatprep.subr.mxu0 0.0
        %1904 = vmatpush2.msra.mxu0 0.0
        %1905 = vmatprep.subr.mxu0 0.0
        %1906 = vmatpush2.msra.mxu0 0.0
        %1907 = vmatprep.subr.mxu0 0.0
        %1908 = vmatpush2.msra.mxu0 0.0
        %1909 = vmatprep.subr.mxu0 0.0
        %1910 = vmatpush2.msra.mxu0 0.0
        %1911 = vmatprep.subr.mxu0 0.0
        %1912 = vmatpush2.msra.mxu0 0.0
        %1913 = vmatprep.subr.mxu0 0.0
        %1914 = vmatpush2.msra.mxu0 0.0
        %1915 = vmatprep.subr.mxu0 0.0
        %1916 = vmatpush2.msra.mxu0 0.0
        %1917 = vmatprep.subr.mxu0 0.0
        %1918 = vmatpush2.msra.mxu0 0.0
        %1919 = vmatprep.subr.mxu0 0.0
        %1920 = vmatpush2.msra.mxu0 0.0
        %1921 = vmatprep.subr.mxu0 0.0
        %1922 = vmatpush2.msra.mxu0 0.0
        %1923 = vmatprep.subr.mxu0 0.0
        %1924 = vmatpush2.msra.mxu0 0.0
        %1925 = vmatprep.subr.mxu0 0.0
        %1926 = vmatpush2.msra.mxu0 0.0
        %1927 = vmatprep.mubr.f32.mxu0 0.0
        %1928 = vmatmul.mubr.f32.gmra.mxu0 %v1848
        %v1929 = vpop.f32.mrf.mxu0
        %v1930 = vadd.f32 0.0, %v1929
        %v1931 = vpop.f32.mrf.mxu0
        %v1932 = vadd.f32 0.0, %v1931
        %1933 = vdwg.mxu0
        %1934 = vmatprep.subr.mxu0 %v750
        %1935 = vmatpush1.msra.mxu0 %v749
        %1936 = vmatprep.subr.mxu0 %v746
        %1937 = vmatpush1.msra.mxu0 %v745
        %1938 = vmatprep.subr.mxu0 %v742
        %1939 = vmatpush1.msra.mxu0 %v741
        %1940 = vmatprep.subr.mxu0 %v738
        %1941 = vmatpush1.msra.mxu0 %v737
        %1942 = vmatprep.subr.mxu0 %v734
        %1943 = vmatpush1.msra.mxu0 %v733
        %1944 = vmatprep.subr.mxu0 %v730
        %1945 = vmatpush1.msra.mxu0 %v729
        %1946 = vmatprep.subr.mxu0 %v726
        %1947 = vmatpush1.msra.mxu0 %v725
        %1948 = vmatprep.subr.mxu0 %v722
        %1949 = vmatpush1.msra.mxu0 %v721
        %1950 = vmatprep.subr.mxu0 %v718
        %1951 = vmatpush1.msra.mxu0 %v717
        %1952 = vmatprep.subr.mxu0 %v714
        %1953 = vmatpush1.msra.mxu0 %v713
        %1954 = vmatprep.subr.mxu0 %v710
        %1955 = vmatpush1.msra.mxu0 %v709
        %1956 = vmatprep.subr.mxu0 %v706
        %1957 = vmatpush1.msra.mxu0 %v705
        %1958 = vmatprep.subr.mxu0 %v702
        %1959 = vmatpush1.msra.mxu0 %v701
        %1960 = vmatprep.subr.mxu0 %v698
        %1961 = vmatpush1.msra.mxu0 %v697
        %1962 = vmatprep.subr.mxu0 %v694
        %1963 = vmatpush1.msra.mxu0 %v693
        %1964 = vmatprep.subr.mxu0 %v690
        %1965 = vmatpush1.msra.mxu0 %v689
        %1966 = vmatprep.subr.mxu0 0.0
        %1967 = vmatpush2.msra.mxu0 0.0
        %1968 = vmatprep.subr.mxu0 0.0
        %1969 = vmatpush2.msra.mxu0 0.0
        %1970 = vmatprep.subr.mxu0 0.0
        %1971 = vmatpush2.msra.mxu0 0.0
        %1972 = vmatprep.subr.mxu0 0.0
        %1973 = vmatpush2.msra.mxu0 0.0
        %1974 = vmatprep.subr.mxu0 0.0
        %1975 = vmatpush2.msra.mxu0 0.0
        %1976 = vmatprep.subr.mxu0 0.0
        %1977 = vmatpush2.msra.mxu0 0.0
        %1978 = vmatprep.subr.mxu0 0.0
        %1979 = vmatpush2.msra.mxu0 0.0
        %1980 = vmatprep.subr.mxu0 0.0
        %1981 = vmatpush2.msra.mxu0 0.0
        %1982 = vmatprep.subr.mxu0 0.0
        %1983 = vmatpush2.msra.mxu0 0.0
        %1984 = vmatprep.subr.mxu0 0.0
        %1985 = vmatpush2.msra.mxu0 0.0
        %1986 = vmatprep.subr.mxu0 0.0
        %1987 = vmatpush2.msra.mxu0 0.0
        %1988 = vmatprep.subr.mxu0 0.0
        %1989 = vmatpush2.msra.mxu0 0.0
        %1990 = vmatprep.subr.mxu0 0.0
        %1991 = vmatpush2.msra.mxu0 0.0
        %1992 = vmatprep.subr.mxu0 0.0
        %1993 = vmatpush2.msra.mxu0 0.0
        %1994 = vmatprep.subr.mxu0 0.0
        %1995 = vmatpush2.msra.mxu0 0.0
        %1996 = vmatprep.subr.mxu0 0.0
        %1997 = vmatpush2.msra.mxu0 0.0
        %1998 = vmatprep.mubr.f32.mxu0 0.0
        %1999 = vmatmul.mubr.f32.gmra.mxu0 %v1848
        %v2000 = vpop.f32.mrf.mxu0
        %v2001 = vadd.f32 0.0, %v2000
        %v2002 = vpop.f32.mrf.mxu0
        %v2003 = vadd.f32 0.0, %v2002
        %2004 = vdwg.mxu0
        %v2005 = vadd.f32 %v1859, %v1930
        %v2006 = vadd.f32 %v1860, %v1932
        %v2007 = vadd.f32 %v1861, %v2001
        %v2008 = vadd.f32 %v1862, %v2003
        %v2009 = vxor.u32 %v2005, 2147483648
        %v2010 = vmul.f32 %v2009, 1.442695
        %v2011 = vpow.pop %v2010
        %v2012 = vadd.f32 %v2011, 1.0
        %v2013 = vrcp.pop %v2012
        %v2014 = vmul.f32 1.0, %v2013
        %v2015 = vxor.u32 %v2006, 2147483648
        %v2016 = vmul.f32 %v2015, 1.442695
        %v2017 = vpow.pop %v2016
        %v2018 = vadd.f32 %v2017, 1.0
        %v2019 = vrcp.pop %v2018
        %v2020 = vmul.f32 1.0, %v2019
        %v2021 = vtanh.pop %v2007
        %v2022 = vxor.u32 %v2008, 2147483648
        %v2023 = vmul.f32 %v2022, 1.442695
        %v2024 = vpow.pop %v2023
        %v2025 = vadd.f32 %v2024, 1.0
        %v2026 = vrcp.pop %v2025
        %v2027 = vmul.f32 1.0, %v2026
        %v2028 = vmul.f32 %v2020, %v1846
        %v2029 = vmul.f32 %v2014, %v2021
        %v2030 = vadd.f32 %v2028, %v2029
        %v2031 = vtanh.pop %v2030
        %v2032 = vmul.f32 %v2027, %v2031
        %s2033 = scalar_lea.vmem [#allocation3], %s1853
        %2034 = vst [vmem:[%s2033] sm:$0xff] %v2032
        %s2035 = smul.u32 %s24, 4294967289
        %s2036 = sadd.s32 %s2035, 7
        %s2037 = smul.u32 %s2036, 8
        %s2038 = sshra.s32 %s2037, 3
        %s2039 = sand.u32 %s2037, 7
        %s2040 = smul.u32 %s2038, 4
        %s2041 = smul.addr %s2040, 8
        %s2042 = scalar_lea.vmem [#allocation2], %s2041
        %v2043 = vld [vmem:[%s2042] sm:$0xff]
        %v2044 = vld [vmem:[%s2042 + $0x8] sm:$0xff]
        %v2045 = vld [vmem:[%s2042 + $0x10] sm:$0xff]
        %v2046 = vld [vmem:[%s2042 + $0x18] sm:$0xff]
        %2047 = vmatprep.subr.mxu0 %v748
        %2048 = vmatpush1.msra.mxu0 %v747
        %2049 = vmatprep.subr.mxu0 %v744
        %2050 = vmatpush1.msra.mxu0 %v743
        %2051 = vmatprep.subr.mxu0 %v740
        %2052 = vmatpush1.msra.mxu0 %v739
        %2053 = vmatprep.subr.mxu0 %v736
        %2054 = vmatpush1.msra.mxu0 %v735
        %2055 = vmatprep.subr.mxu0 %v732
        %2056 = vmatpush1.msra.mxu0 %v731
        %2057 = vmatprep.subr.mxu0 %v728
        %2058 = vmatpush1.msra.mxu0 %v727
        %2059 = vmatprep.subr.mxu0 %v724
        %2060 = vmatpush1.msra.mxu0 %v723
        %2061 = vmatprep.subr.mxu0 %v720
        %2062 = vmatpush1.msra.mxu0 %v719
        %2063 = vmatprep.subr.mxu0 %v716
        %2064 = vmatpush1.msra.mxu0 %v715
        %2065 = vmatprep.subr.mxu0 %v712
        %2066 = vmatpush1.msra.mxu0 %v711
        %2067 = vmatprep.subr.mxu0 %v708
        %2068 = vmatpush1.msra.mxu0 %v707
        %2069 = vmatprep.subr.mxu0 %v704
        %2070 = vmatpush1.msra.mxu0 %v703
        %2071 = vmatprep.subr.mxu0 %v700
        %2072 = vmatpush1.msra.mxu0 %v699
        %2073 = vmatprep.subr.mxu0 %v696
        %2074 = vmatpush1.msra.mxu0 %v695
        %2075 = vmatprep.subr.mxu0 %v692
        %2076 = vmatpush1.msra.mxu0 %v691
        %2077 = vmatprep.subr.mxu0 %v688
        %2078 = vmatpush1.msra.mxu0 %v687
        %2079 = vmatprep.subr.mxu0 0.0
        %2080 = vmatpush2.msra.mxu0 0.0
        %2081 = vmatprep.subr.mxu0 0.0
        %2082 = vmatpush2.msra.mxu0 0.0
        %2083 = vmatprep.subr.mxu0 0.0
        %2084 = vmatpush2.msra.mxu0 0.0
        %2085 = vmatprep.subr.mxu0 0.0
        %2086 = vmatpush2.msra.mxu0 0.0
        %2087 = vmatprep.subr.mxu0 0.0
        %2088 = vmatpush2.msra.mxu0 0.0
        %2089 = vmatprep.subr.mxu0 0.0
        %2090 = vmatpush2.msra.mxu0 0.0
        %2091 = vmatprep.subr.mxu0 0.0
        %2092 = vmatpush2.msra.mxu0 0.0
        %2093 = vmatprep.subr.mxu0 0.0
        %2094 = vmatpush2.msra.mxu0 0.0
        %2095 = vmatprep.subr.mxu0 0.0
        %2096 = vmatpush2.msra.mxu0 0.0
        %2097 = vmatprep.subr.mxu0 0.0
        %2098 = vmatpush2.msra.mxu0 0.0
        %2099 = vmatprep.subr.mxu0 0.0
        %2100 = vmatpush2.msra.mxu0 0.0
        %2101 = vmatprep.subr.mxu0 0.0
        %2102 = vmatpush2.msra.mxu0 0.0
        %2103 = vmatprep.subr.mxu0 0.0
        %2104 = vmatpush2.msra.mxu0 0.0
        %2105 = vmatprep.subr.mxu0 0.0
        %2106 = vmatpush2.msra.mxu0 0.0
        %2107 = vmatprep.subr.mxu0 0.0
        %2108 = vmatpush2.msra.mxu0 0.0
        %2109 = vmatprep.subr.mxu0 0.0
        %2110 = vmatpush2.msra.mxu0 0.0
        %2111 = vmatprep.mubr.f32.mxu0 0.0
        %2112 = vmatmul.mubr.f32.gmra.mxu0 %v2032
        %v2113 = vpop.f32.mrf.mxu0
        %v2114 = vadd.f32 0.0, %v2113
        %v2115 = vpop.f32.mrf.mxu0
        %v2116 = vadd.f32 0.0, %v2115
        %2117 = vdwg.mxu0
        %2118 = vmatprep.subr.mxu0 %v750
        %2119 = vmatpush1.msra.mxu0 %v749
        %2120 = vmatprep.subr.mxu0 %v746
        %2121 = vmatpush1.msra.mxu0 %v745
        %2122 = vmatprep.subr.mxu0 %v742
        %2123 = vmatpush1.msra.mxu0 %v741
        %2124 = vmatprep.subr.mxu0 %v738
        %2125 = vmatpush1.msra.mxu0 %v737
        %2126 = vmatprep.subr.mxu0 %v734
        %2127 = vmatpush1.msra.mxu0 %v733
        %2128 = vmatprep.subr.mxu0 %v730
        %2129 = vmatpush1.msra.mxu0 %v729
        %2130 = vmatprep.subr.mxu0 %v726
        %2131 = vmatpush1.msra.mxu0 %v725
        %2132 = vmatprep.subr.mxu0 %v722
        %2133 = vmatpush1.msra.mxu0 %v721
        %2134 = vmatprep.subr.mxu0 %v718
        %2135 = vmatpush1.msra.mxu0 %v717
        %2136 = vmatprep.subr.mxu0 %v714
        %2137 = vmatpush1.msra.mxu0 %v713
        %2138 = vmatprep.subr.mxu0 %v710
        %2139 = vmatpush1.msra.mxu0 %v709
        %2140 = vmatprep.subr.mxu0 %v706
        %2141 = vmatpush1.msra.mxu0 %v705
        %2142 = vmatprep.subr.mxu0 %v702
        %2143 = vmatpush1.msra.mxu0 %v701
        %2144 = vmatprep.subr.mxu0 %v698
        %2145 = vmatpush1.msra.mxu0 %v697
        %2146 = vmatprep.subr.mxu0 %v694
        %2147 = vmatpush1.msra.mxu0 %v693
        %2148 = vmatprep.subr.mxu0 %v690
        %2149 = vmatpush1.msra.mxu0 %v689
        %2150 = vmatprep.subr.mxu0 0.0
        %2151 = vmatpush2.msra.mxu0 0.0
        %2152 = vmatprep.subr.mxu0 0.0
        %2153 = vmatpush2.msra.mxu0 0.0
        %2154 = vmatprep.subr.mxu0 0.0
        %2155 = vmatpush2.msra.mxu0 0.0
        %2156 = vmatprep.subr.mxu0 0.0
        %2157 = vmatpush2.msra.mxu0 0.0
        %2158 = vmatprep.subr.mxu0 0.0
        %2159 = vmatpush2.msra.mxu0 0.0
        %2160 = vmatprep.subr.mxu0 0.0
        %2161 = vmatpush2.msra.mxu0 0.0
        %2162 = vmatprep.subr.mxu0 0.0
        %2163 = vmatpush2.msra.mxu0 0.0
        %2164 = vmatprep.subr.mxu0 0.0
        %2165 = vmatpush2.msra.mxu0 0.0
        %2166 = vmatprep.subr.mxu0 0.0
        %2167 = vmatpush2.msra.mxu0 0.0
        %2168 = vmatprep.subr.mxu0 0.0
        %2169 = vmatpush2.msra.mxu0 0.0
        %2170 = vmatprep.subr.mxu0 0.0
        %2171 = vmatpush2.msra.mxu0 0.0
        %2172 = vmatprep.subr.mxu0 0.0
        %2173 = vmatpush2.msra.mxu0 0.0
        %2174 = vmatprep.subr.mxu0 0.0
        %2175 = vmatpush2.msra.mxu0 0.0
        %2176 = vmatprep.subr.mxu0 0.0
        %2177 = vmatpush2.msra.mxu0 0.0
        %2178 = vmatprep.subr.mxu0 0.0
        %2179 = vmatpush2.msra.mxu0 0.0
        %2180 = vmatprep.subr.mxu0 0.0
        %2181 = vmatpush2.msra.mxu0 0.0
        %2182 = vmatprep.mubr.f32.mxu0 0.0
        %2183 = vmatmul.mubr.f32.gmra.mxu0 %v2032
        %v2184 = vpop.f32.mrf.mxu0
        %v2185 = vadd.f32 0.0, %v2184
        %v2186 = vpop.f32.mrf.mxu0
        %v2187 = vadd.f32 0.0, %v2186
        %2188 = vdwg.mxu0
        %v2189 = vadd.f32 %v2043, %v2114
        %v2190 = vadd.f32 %v2044, %v2116
        %v2191 = vadd.f32 %v2045, %v2185
        %v2192 = vadd.f32 %v2046, %v2187
        %v2193 = vxor.u32 %v2189, 2147483648
        %v2194 = vmul.f32 %v2193, 1.442695
        %v2195 = vpow.pop %v2194
        %v2196 = vadd.f32 %v2195, 1.0
        %v2197 = vrcp.pop %v2196
        %v2198 = vmul.f32 1.0, %v2197
        %v2199 = vxor.u32 %v2190, 2147483648
        %v2200 = vmul.f32 %v2199, 1.442695
        %v2201 = vpow.pop %v2200
        %v2202 = vadd.f32 %v2201, 1.0
        %v2203 = vrcp.pop %v2202
        %v2204 = vmul.f32 1.0, %v2203
        %v2205 = vtanh.pop %v2191
        %v2206 = vxor.u32 %v2192, 2147483648
        %v2207 = vmul.f32 %v2206, 1.442695
        %v2208 = vpow.pop %v2207
        %v2209 = vadd.f32 %v2208, 1.0
        %v2210 = vrcp.pop %v2209
        %v2211 = vmul.f32 1.0, %v2210
        %v2212 = vmul.f32 %v2204, %v2030
        %v2213 = vmul.f32 %v2198, %v2205
        %v2214 = vadd.f32 %v2212, %v2213
        %v2215 = vtanh.pop %v2214
        %v2216 = vmul.f32 %v2211, %v2215
        %s2217 = scalar_lea.vmem [#allocation3], %s2037
        %2218 = vst [vmem:[%s2217] sm:$0xff] %v2216
        %v2219 = vld [vmem:[#allocation3] sm:$0xff]
        %v2220 = vld [vmem:[#allocation3 + $0x8] sm:$0xff]
        %v2221 = vld [vmem:[#allocation3 + $0x10] sm:$0xff]
        %v2222 = vld [vmem:[#allocation3 + $0x18] sm:$0xff]
        %v2223 = vld [vmem:[#allocation3 + $0x20] sm:$0xff]
        %v2224 = vld [vmem:[#allocation3 + $0x28] sm:$0xff]
        %v2225 = vld [vmem:[#allocation3 + $0x30] sm:$0xff]
        %v2226 = vld [vmem:[#allocation3 + $0x38] sm:$0xff]
        %v2227 = vld [vmem:[%s318] sm:$0xff]
        %v2228 = vld [vmem:[%s318 + $0x8] sm:$0xff]
        %v2229 = vld [vmem:[%s318 + $0x10] sm:$0xff]
        %v2230 = vld [vmem:[%s318 + $0x18] sm:$0xff]
        %v2231 = vld [vmem:[%s318 + $0x20] sm:$0xff]
        %v2232 = vld [vmem:[%s318 + $0x28] sm:$0xff]
        %v2233 = vld [vmem:[%s318 + $0x30] sm:$0xff]
        %v2234 = vld [vmem:[%s318 + $0x38] sm:$0xff]
        %v2235 = vld [vmem:[%s318 + $0x40] sm:$0xff]
        %v2236 = vld [vmem:[%s318 + $0x48] sm:$0xff]
        %v2237 = vld [vmem:[%s318 + $0x50] sm:$0xff]
        %v2238 = vld [vmem:[%s318 + $0x58] sm:$0xff]
        %v2239 = vld [vmem:[%s318 + $0x60] sm:$0xff]
        %v2240 = vld [vmem:[%s318 + $0x68] sm:$0xff]
        %v2241 = vld [vmem:[%s318 + $0x70] sm:$0xff]
        %v2242 = vld [vmem:[%s318 + $0x78] sm:$0xff]
        %v2243 = vld [vmem:[%s365] sm:$0x1]
        %v2245 = vlaneseq
        %v2246 = vshrl.u32 %v2245, 7
        %v2247 = vsub.s32 0, %v2246
        %v2248 = vrot.slane %v2243, %v2247
        %2250 = vmatprep.subr.mxu0 0.0
        %2251 = vmatpush1.msra.mxu0 %v2242
        %2252 = vmatprep.subr.mxu0 0.0
        %2253 = vmatpush1.msra.mxu0 %v2241
        %2254 = vmatprep.subr.mxu0 0.0
        %2255 = vmatpush1.msra.mxu0 %v2240
        %2256 = vmatprep.subr.mxu0 0.0
        %2257 = vmatpush1.msra.mxu0 %v2239
        %2258 = vmatprep.subr.mxu0 0.0
        %2259 = vmatpush1.msra.mxu0 %v2238
        %2260 = vmatprep.subr.mxu0 0.0
        %2261 = vmatpush1.msra.mxu0 %v2237
        %2262 = vmatprep.subr.mxu0 0.0
        %2263 = vmatpush1.msra.mxu0 %v2236
        %2264 = vmatprep.subr.mxu0 0.0
        %2265 = vmatpush1.msra.mxu0 %v2235
        %2266 = vmatprep.subr.mxu0 0.0
        %2267 = vmatpush1.msra.mxu0 %v2234
        %2268 = vmatprep.subr.mxu0 0.0
        %2269 = vmatpush1.msra.mxu0 %v2233
        %2270 = vmatprep.subr.mxu0 0.0
        %2271 = vmatpush1.msra.mxu0 %v2232
        %2272 = vmatprep.subr.mxu0 0.0
        %2273 = vmatpush1.msra.mxu0 %v2231
        %2274 = vmatprep.subr.mxu0 0.0
        %2275 = vmatpush1.msra.mxu0 %v2230
        %2276 = vmatprep.subr.mxu0 0.0
        %2277 = vmatpush1.msra.mxu0 %v2229
        %2278 = vmatprep.subr.mxu0 0.0
        %2279 = vmatpush1.msra.mxu0 %v2228
        %2280 = vmatprep.subr.mxu0 0.0
        %2281 = vmatpush1.msra.mxu0 %v2227
        %2282 = vmatprep.subr.mxu0 0.0
        %2283 = vmatpush2.msra.mxu0 0.0
        %2284 = vmatprep.subr.mxu0 0.0
        %2285 = vmatpush2.msra.mxu0 0.0
        %2286 = vmatprep.subr.mxu0 0.0
        %2287 = vmatpush2.msra.mxu0 0.0
        %2288 = vmatprep.subr.mxu0 0.0
        %2289 = vmatpush2.msra.mxu0 0.0
        %2290 = vmatprep.subr.mxu0 0.0
        %2291 = vmatpush2.msra.mxu0 0.0
        %2292 = vmatprep.subr.mxu0 0.0
        %2293 = vmatpush2.msra.mxu0 0.0
        %2294 = vmatprep.subr.mxu0 0.0
        %2295 = vmatpush2.msra.mxu0 0.0
        %2296 = vmatprep.subr.mxu0 0.0
        %2297 = vmatpush2.msra.mxu0 0.0
        %2298 = vmatprep.subr.mxu0 0.0
        %2299 = vmatpush2.msra.mxu0 0.0
        %2300 = vmatprep.subr.mxu0 0.0
        %2301 = vmatpush2.msra.mxu0 0.0
        %2302 = vmatprep.subr.mxu0 0.0
        %2303 = vmatpush2.msra.mxu0 0.0
        %2304 = vmatprep.subr.mxu0 0.0
        %2305 = vmatpush2.msra.mxu0 0.0
        %2306 = vmatprep.subr.mxu0 0.0
        %2307 = vmatpush2.msra.mxu0 0.0
        %2308 = vmatprep.subr.mxu0 0.0
        %2309 = vmatpush2.msra.mxu0 0.0
        %2310 = vmatprep.subr.mxu0 0.0
        %2311 = vmatpush2.msra.mxu0 0.0
        %2312 = vmatprep.subr.mxu0 0.0
        %2313 = vmatpush2.msra.mxu0 0.0
        %2314 = vmatprep.mubr.f32.mxu0 0.0
        %2315 = vmatmul.mubr.f32.gmra.mxu0 %v2219
        %v2316 = vpop.f32.mrf.mxu0
        %v2317 = vadd.f32 %v2248, %v2316
        %v2318 = vpop.f32.mrf.mxu0
        %2319 = vmatprep.mubr.f32.mxu0 0.0
        %2320 = vmatmul.mubr.f32.gmra.mxu0 %v2220
        %v2321 = vpop.f32.mrf.mxu0
        %v2322 = vadd.f32 %v2248, %v2321
        %v2323 = vpop.f32.mrf.mxu0
        %2324 = vmatprep.mubr.f32.mxu0 0.0
        %2325 = vmatmul.mubr.f32.gmra.mxu0 %v2221
        %v2326 = vpop.f32.mrf.mxu0
        %v2327 = vadd.f32 %v2248, %v2326
        %v2328 = vpop.f32.mrf.mxu0
        %2329 = vmatprep.mubr.f32.mxu0 0.0
        %2330 = vmatmul.mubr.f32.gmra.mxu0 %v2222
        %v2331 = vpop.f32.mrf.mxu0
        %v2332 = vadd.f32 %v2248, %v2331
        %v2333 = vpop.f32.mrf.mxu0
        %2334 = vmatprep.mubr.f32.mxu0 0.0
        %2335 = vmatmul.mubr.f32.gmra.mxu0 %v2223
        %v2336 = vpop.f32.mrf.mxu0
        %v2337 = vadd.f32 %v2248, %v2336
        %v2338 = vpop.f32.mrf.mxu0
        %2339 = vmatprep.mubr.f32.mxu0 0.0
        %2340 = vmatmul.mubr.f32.gmra.mxu0 %v2224
        %v2341 = vpop.f32.mrf.mxu0
        %v2342 = vadd.f32 %v2248, %v2341
        %v2343 = vpop.f32.mrf.mxu0
        %2344 = vmatprep.mubr.f32.mxu0 0.0
        %2345 = vmatmul.mubr.f32.gmra.mxu0 %v2225
        %v2346 = vpop.f32.mrf.mxu0
        %v2347 = vadd.f32 %v2248, %v2346
        %v2348 = vpop.f32.mrf.mxu0
        %2349 = vmatprep.mubr.f32.mxu0 0.0
        %2350 = vmatmul.mubr.f32.gmra.mxu0 %v2226
        %v2351 = vpop.f32.mrf.mxu0
        %v2352 = vadd.f32 %v2248, %v2351
        %v2353 = vpop.f32.mrf.mxu0
        %2354 = vdwg.mxu0
        %p2355 = scmp.eq.s32.totalorder %s24, 0
        // Predicated region
        $region57: #{tpu_custom_call.1} parent=43 // pred_check
          %p2356 = pneg %p2355
        $region58: #{tpu_custom_call.1} parent=43 // pred_check_branch
          %2358 = sbr.rel (%p2356) target = $region60
        $region59: #{tpu_custom_call.1} parent=43 // pred_region
          %2359 = vst [vmem:[#allocation10] sm:$0xff] %v2317
          %2360 = vst [vmem:[#allocation10 + $0x8] sm:$0xff] %v2322
          %2361 = vst [vmem:[#allocation10 + $0x10] sm:$0xff] %v2327
          %2362 = vst [vmem:[#allocation10 + $0x18] sm:$0xff] %v2332
          %2363 = vst [vmem:[#allocation10 + $0x20] sm:$0xff] %v2337
          %2364 = vst [vmem:[#allocation10 + $0x28] sm:$0xff] %v2342
          %2365 = vst [vmem:[#allocation10 + $0x30] sm:$0xff] %v2347
          %2366 = vst [vmem:[#allocation10 + $0x38] sm:$0xff] %v2352
        $region60: #{tpu_custom_call.1} parent=43 // pred_fallthru
          _
        %p2367 = scmp.eq.s32.totalorder %s24, 1
        // Predicated region
        $region61: #{tpu_custom_call.1} parent=43 // pred_check
          %p2368 = pneg %p2367
        $region62: #{tpu_custom_call.1} parent=43 // pred_check_branch
          %2370 = sbr.rel (%p2368) target = $region64
        $region63: #{tpu_custom_call.1} parent=43 // pred_region
          %v2371 = vld [vmem:[#allocation10] sm:$0xff]
          %v2372 = vld [vmem:[#allocation10 + $0x8] sm:$0xff]
          %v2373 = vld [vmem:[#allocation10 + $0x10] sm:$0xff]
          %v2374 = vld [vmem:[#allocation10 + $0x18] sm:$0xff]
          %v2375 = vld [vmem:[#allocation10 + $0x20] sm:$0xff]
          %v2376 = vld [vmem:[#allocation10 + $0x28] sm:$0xff]
          %v2377 = vld [vmem:[#allocation10 + $0x30] sm:$0xff]
          %v2378 = vld [vmem:[#allocation10 + $0x38] sm:$0xff]
          %v2379 = vadd.f32 %v2371, %v2317
          %v2380 = vadd.f32 %v2372, %v2322
          %v2381 = vadd.f32 %v2373, %v2327
          %v2382 = vadd.f32 %v2374, %v2332
          %v2383 = vadd.f32 %v2375, %v2337
          %v2384 = vadd.f32 %v2376, %v2342
          %v2385 = vadd.f32 %v2377, %v2347
          %v2386 = vadd.f32 %v2378, %v2352
          %2387 = vst [vmem:[#allocation10] sm:$0xff] %v2379
          %2388 = vst [vmem:[#allocation10 + $0x8] sm:$0xff] %v2380
          %2389 = vst [vmem:[#allocation10 + $0x10] sm:$0xff] %v2381
          %2390 = vst [vmem:[#allocation10 + $0x18] sm:$0xff] %v2382
          %2391 = vst [vmem:[#allocation10 + $0x20] sm:$0xff] %v2383
          %2392 = vst [vmem:[#allocation10 + $0x28] sm:$0xff] %v2384
          %2393 = vst [vmem:[#allocation10 + $0x30] sm:$0xff] %v2385
          %2394 = vst [vmem:[#allocation10 + $0x38] sm:$0xff] %v2386
        $region64: #{tpu_custom_call.1} parent=43 // pred_fallthru
          _
        // Predicated region
        $region65: #{tpu_custom_call.1} parent=43 // pred_check
          %p2395 = pneg %p188
        $region66: #{tpu_custom_call.1} parent=43 // pred_check_branch
          %2397 = sbr.rel (%p2395) target = $region68
        $region67: #{tpu_custom_call.1} parent=43 // pred_region
          %s2399 = ssub.s32 1024, 1024
          %2400 = vsyncadd [#allocation6], %s2399
          %s2401 = sshll.u32 [#allocation10], 4
          %s2402 = int_to_ptr.vmem [resolvable:$true] %s2401
          %2407 = dma.vmem_to_hbm [thread:$0]  %s2402, 1024, %s6, [#allocation6], 128, 128, 8
        $region68: #{tpu_custom_call.1} parent=43 // pred_fallthru
          _
        // Predicated region
        $region69: #{tpu_custom_call.1} parent=43 // pred_check
          %p2408 = pneg %p188
        $region70: #{tpu_custom_call.1} parent=43 // pred_check_branch
          %2410 = sbr.rel (%p2408) target = $region72
        $region71: #{tpu_custom_call.1} parent=43 // pred_region
          %2411 = dma.done [#allocation6], 1024
        $region72: #{tpu_custom_call.1} parent=43 // pred_fallthru
          _
      $region44: #{tpu_custom_call.1} parent=5 // pred_fallthru
        _
      %p2412 = scmp.le.s32.totalorder 2, %s19
      // Predicated region
      $region73: #{tpu_custom_call.1} parent=5 // pred_check
        %p2413 = pneg %p2412
      $region74: #{tpu_custom_call.1} parent=5 // pred_check_branch
        %2415 = sbr.rel (%p2413) target = $region76
      $region75: #{tpu_custom_call.1} parent=5 // pred_region
        %s2416 = ssub.s32 %s19, 2
      $region76: #{tpu_custom_call.1} parent=5 // pred_fallthru
        _
    $region6: #{tpu_custom_call.1} parent=1 // loop_footer
      %s23 = sadd.s32 1, %s19
    $region7: #{tpu_custom_call.1} parent=1 // loop_footer_branch
      %18 = sbr.rel target = $region3
    $region8: #{tpu_custom_call.1} parent=1 // loop_exit
      _
    %2417 = vsyncpa [#allocation5], 1
    %s2418 = scalar_lea.sflag [#allocation5], 1
    %2419 = vsyncpa %s2418, 1
    %2420 = vsyncpa [#allocation8], 1
    %s2421 = scalar_lea.sflag [#allocation8], 1
    %2422 = vsyncpa %s2421, 1
    %2423 = vsyncpa [#allocation6], 1
    %s2424 = scalar_lea.sflag [#allocation6], 1
    %2425 = vsyncpa %s2424, 1

</llo_original>
